<compile_context>
chip_gen: v6e
topology: v6e:2x2x1
jax: 0.10.0
libtpu: 0.0.40
codegen_flags: <defaults>
</compile_context>

<pallas_src>
import functools

import jax
import jax.numpy as jnp
from jax.experimental import pallas as pl
from jax.experimental.pallas import tpu as pltpu


LANE = 128


# ----------------------------------------------------------------------------
# Fused kernel: patch-embed (stand-in backbone) + concat-pool + head MLP
# ----------------------------------------------------------------------------
def _fused_kernel(p_ref, w_ref, b_ref, w1_ref, b1_ref, w2_ref, b2_ref,
                  o_ref, sum_s, max_s, *, inv_rows):
    """One (sample b, row-chunk r) grid step.

    p_ref : (TM, K)        bf16 patch rows of sample b (K = 3*P*P)
    w_ref : (K, C)         bf16 patch-embed weight      (resident)
    b_ref : (1, C)         f32  patch-embed bias        (resident)
    w1_ref: (2C, H)        f32  head Linear1 weight     (resident)
    b1_ref: (1, H)
    w2_ref: (H, CO_PAD)    f32  head Linear2 weight, BN folded, lane-padded
    b2_ref: (1, CO_PAD)
    o_ref : (1, CO_PAD)    output row for sample b (written on last r only)
    sum_s, max_s : (1, C)  f32 running sum / max accumulators (VMEM scratch)
    """
    r = pl.program_id(1)

    @pl.when(r == 0)
    def _init():
        sum_s[...] = jnp.zeros_like(sum_s)
        max_s[...] = jnp.full_like(max_s, -jnp.inf)

    # Stand-in feature extractor: patch conv as matmul (bf16 MXU, f32 acc) + ReLU.
    feats = jnp.dot(p_ref[...], w_ref[...], preferred_element_type=jnp.float32)
    feats = jnp.maximum(feats + b_ref[...], 0.0)                  # (TM, C)

    # Fused AdaptiveConcatPool2d accumulation.  The BasicHead view/permute only
    # regroups the n_tiles maps of one sample into a single (C, h*n_tiles, w)
    # map; since the pooling is global, accumulating over all (tile, h, w)
    # rows per (sample, channel) is exactly equivalent.
    sum_s[...] += jnp.sum(feats, axis=0, keepdims=True)
    max_s[...] = jnp.maximum(max_s[...], jnp.max(feats, axis=0, keepdims=True))

    @pl.when(r == pl.num_programs(1) - 1)
    def _finalize():
        c = sum_s.shape[1]
        avg = sum_s[...] * inv_rows                               # (1, C)
        mx = max_s[...]                                           # (1, C)
        # Linear(2C, H) applied to cat([avg, max]) == avg@W1[:C] + max@W1[C:]
        h = (jnp.dot(avg, w1_ref[:c, :], preferred_element_type=jnp.float32)
             + jnp.dot(mx, w1_ref[c:, :], preferred_element_type=jnp.float32)
             + b1_ref[...])
        # Mish: x * tanh(softplus(x)), numerically stable softplus.
        sp = jnp.maximum(h, 0.0) + jnp.log1p(jnp.exp(-jnp.abs(h)))
        h = h * jnp.tanh(sp)
        # BatchNorm1d (eval) already folded into w2/b2; Dropouts are identity.
        o = jnp.dot(h, w2_ref[...], preferred_element_type=jnp.float32)
        o_ref[...] = o + b2_ref[...]


def _fused_forward(patches, conv_w, conv_b, w1, b1, w2f, b2f, *, row_tile):
    """patches: (B, S, K) bf16 -> (B, CO_PAD) f32."""
    B, S, K = patches.shape
    C = conv_w.shape[1]
    H = w1.shape[1]
    CO = w2f.shape[1]
    assert S % row_tile == 0, (S, row_tile)
    R = S // row_tile

    kernel = functools.partial(_fused_kernel, inv_rows=1.0 / float(S))

    out = pl.pallas_call(
        kernel,
        out_shape=jax.ShapeDtypeStruct((B, 1, CO), jnp.float32),
        grid_spec=pltpu.PrefetchScalarGridSpec(
            num_scalar_prefetch=0,
            grid=(B, R),
            in_specs=[
                pl.BlockSpec((None, row_tile, K), lambda b, r: (b, r, 0)),
                pl.BlockSpec((K, C), lambda b, r: (0, 0)),
                pl.BlockSpec((1, C), lambda b, r: (0, 0)),
                pl.BlockSpec((2 * C, H), lambda b, r: (0, 0)),
                pl.BlockSpec((1, H), lambda b, r: (0, 0)),
                pl.BlockSpec((H, CO), lambda b, r: (0, 0)),
                pl.BlockSpec((1, CO), lambda b, r: (0, 0)),
            ],
            out_specs=pl.BlockSpec((None, 1, CO), lambda b, r: (b, 0, 0)),
            scratch_shapes=[
                pltpu.VMEM((1, C), jnp.float32),   # running sum
                pltpu.VMEM((1, C), jnp.float32),   # running max
            ],
        ),
        compiler_params=pltpu.CompilerParams(
            dimension_semantics=("parallel", "arbitrary")),
    )(patches, conv_w, conv_b, w1, b1, w2f, b2f)
    return out.reshape(B, CO)


# ----------------------------------------------------------------------------
# Wrapper
# ----------------------------------------------------------------------------
def _pick_row_tile(s_rows):
    for cand in (512, 256, 128, 64, 32, 16, 8):
        if s_rows % cand == 0:
            return cand
    return s_rows  # falls back to a single full-S block


@functools.partial(
    jax.jit,
    static_argnames=("n_tiles", "tile_size", "patch", "c_out", "row_tile"))
def model_forward(x, prepped, *, n_tiles, tile_size, patch, c_out,
                  row_tile=None):
    """x: (B, n_tiles, 3, tile_size, tile_size) float32 -> (B, c_out)."""
    B = x.shape[0]
    T, P = tile_size, patch
    f = T // P                       # feature-map spatial size per tile
    S = n_tiles * f * f              # pooled rows per sample
    K = 3 * P * P
    if row_tile is None:
        row_tile = _pick_row_tile(S)

    # h = x.view(-1, 3, T, T); cast to bf16 *before* the extraction transpose
    # so the XLA-side transpose moves half the bytes.
    xb = x.astype(jnp.bfloat16)
    imgs = xb.reshape(B * n_tiles, 3, T, T)
    # extract non-overlapping patches, flattened in (c, kh, kw) order (NCHW conv)
    patches = imgs.reshape(B * n_tiles, 3, f, P, f, P)
    patches = patches.transpose(0, 2, 4, 1, 3, 5)      # (N, f, f, 3, P, P)
    patches = patches.reshape(B, S, K)

    out_pad = _fused_forward(
        patches,
        prepped["conv_w2d"], prepped["conv_b"],
        prepped["w1"], prepped["b1"],
        prepped["w2_folded"], prepped["b2_folded"],
        row_tile=row_tile)
    return out_pad[:, :c_out]


# ----------------------------------------------------------------------------
# Parameters
# ----------------------------------------------------------------------------
def make_params(key, *, c_feat, patch, hidden, c_out):
    ks = jax.random.split(key, 6)
    conv_w = jax.random.normal(ks[0], (c_feat, 3, patch, patch), jnp.float32) * 0.05
    conv_w2d = conv_w.reshape(c_feat, -1).T                    # (3*P*P, c_feat)
    conv_b = jax.random.normal(ks[1], (1, c_feat), jnp.float32) * 0.01
    w1 = jax.random.normal(ks[2], (2 * c_feat, hidden), jnp.float32) * 0.02
    b1 = jax.random.normal(ks[3], (1, hidden), jnp.float32) * 0.01
    w2 = jax.random.normal(ks[4], (hidden, c_out), jnp.float32) * 0.02
    b2 = jax.random.normal(ks[5], (1, c_out), jnp.float32) * 0.01
    return {
        "conv_w2d": conv_w2d, "conv_b": conv_b,
        "w1": w1, "b1": b1, "w2": w2, "b2": b2,
        # BatchNorm1d default init / running stats (eval mode)
        "bn_gamma": jnp.ones((1, hidden), jnp.float32),
        "bn_beta": jnp.zeros((1, hidden), jnp.float32),
        "bn_mean": jnp.zeros((1, hidden), jnp.float32),
        "bn_var": jnp.ones((1, hidden), jnp.float32),
    }


def prepare_inference_params(params, *, eps=1e-5):
    """One-time prep: fold eval BatchNorm1d into Linear2, pad its output to a
    lane-dense 128 width, cast the patch-embed matmul weight to bf16."""
    scale = params["bn_gamma"] * jax.lax.rsqrt(params["bn_var"] + eps)   # (1, H)
    shift = params["bn_beta"] - params["bn_mean"] * scale                # (1, H)
    w2, b2 = params["w2"], params["b2"]                                  # (H, co), (1, co)
    w2f = w2 * scale.T                                                   # (H, co)
    b2f = b2 + shift @ w2                                                # (1, co)
    c_out = w2.shape[1]
    co_pad = max(LANE, ((c_out + LANE - 1) // LANE) * LANE)
    w2fp = jnp.zeros((w2.shape[0], co_pad), jnp.float32).at[:, :c_out].set(w2f)
    b2fp = jnp.zeros((1, co_pad), jnp.float32).at[:, :c_out].set(b2f)
    return {
        "conv_w2d": params["conv_w2d"].astype(jnp.bfloat16),
        "conv_b": params["conv_b"],
        "w1": params["w1"], "b1": params["b1"],
        "w2_folded": w2fp, "b2_folded": b2fp,
    }


# ----------------------------------------------------------------------------
# Pure-JAX reference (same stand-in backbone, unfolded BN path)
# ----------------------------------------------------------------------------
def reference_forward(x, params, *, n_tiles, tile_size, patch, eps=1e-5):
    B = x.shape[0]
    T, P = tile_size, patch
    f = T // P
    xb = x.astype(jnp.bfloat16)
    imgs = xb.reshape(B * n_tiles, 3, T, T)
    patches = imgs.reshape(B * n_tiles, 3, f, P, f, P).transpose(0, 2, 4, 1, 3, 5)
    patches = patches.reshape(B, n_tiles * f * f, 3 * P * P)
    feats = jnp.dot(patches, params["conv_w2d"].astype(jnp.bfloat16),
                    preferred_element_type=jnp.float32) + params["conv_b"]
    feats = jnp.maximum(feats, 0.0)                     # (B, S, C)
    pooled = jnp.concatenate([feats.mean(axis=1), feats.max(axis=1)], axis=1)
    h = pooled @ params["w1"] + params["b1"]
    sp = jnp.maximum(h, 0.0) + jnp.log1p(jnp.exp(-jnp.abs(h)))
    h = h * jnp.tanh(sp)
    h = (h - params["bn_mean"]) * jax.lax.rsqrt(params["bn_var"] + eps)
    h = h * params["bn_gamma"] + params["bn_beta"]
    return h @ params["w2"] + params["b2"]


# ----------------------------------------------------------------------------
# Main
# ----------------------------------------------------------------------------
if __name__ == "__main__":
    # Small, module-consistent shapes (scaled down from n_tiles=12, tile=128).
    B, N_TILES, TILE, PATCH = 2, 4, 32, 8
    C_FEAT, HIDDEN, C_OUT = 256, 512, 6

    key = jax.random.PRNGKey(0)
    k_x, k_p = jax.random.split(key)
    x = jax.random.normal(k_x, (B, N_TILES, 3, TILE, TILE), jnp.float32)
    raw_params = make_params(k_p, c_feat=C_FEAT, patch=PATCH,
                             hidden=HIDDEN, c_out=C_OUT)
    prepped = prepare_inference_params(raw_params)

    # row_tile=32 -> grid (B, 2): exercises the multi-step pool accumulation.
    out = model_forward(x, prepped, n_tiles=N_TILES, tile_size=TILE,
                        patch=PATCH, c_out=C_OUT, row_tile=32)
    out = jax.block_until_ready(out)
    assert out.shape == (B, C_OUT), out.shape

    ref = reference_forward(x, raw_params, n_tiles=N_TILES,
                            tile_size=TILE, patch=PATCH)
    max_err = float(jnp.max(jnp.abs(out - ref)))
    assert max_err < 1e-2, f"max abs err vs reference: {max_err}"
    print("KERNEL_OK")
</pallas_src>

<mosaic_0001>
module attributes {stable_mosaic.version = 11 : i64} {
  func.func @_fused_kernel(%arg0: i32, %arg1: i32, %arg2: memref<1x32x192xbf16, #tpu.memory_space<vmem>>, %arg3: memref<192x256xbf16, #tpu.memory_space<vmem>>, %arg4: memref<1x256xf32, #tpu.memory_space<vmem>>, %arg5: memref<512x512xf32, #tpu.memory_space<vmem>>, %arg6: memref<1x512xf32, #tpu.memory_space<vmem>>, %arg7: memref<512x128xf32, #tpu.memory_space<vmem>>, %arg8: memref<1x128xf32, #tpu.memory_space<vmem>>, %arg9: memref<1x1x128xf32, #tpu.memory_space<vmem>>, %arg10: memref<1x256xf32, #tpu.memory_space<vmem>>, %arg11: memref<1x256xf32, #tpu.memory_space<vmem>>) attributes {dimension_semantics = [#tpu.dimension_semantics<parallel>, #tpu.dimension_semantics<arbitrary>], iteration_bounds = array<i64: 2, 2>, scalar_prefetch = 0 : i64, scratch_operands = 2 : i64, tpu.core_type = #tpu.core_type<tc>, window_params = [{transform_indices = @transform_0, window_bounds = array<i64: 1, 32, 192>}, {pipeline_mode = #tpu.pipeline_mode<synchronous>, transform_indices = @transform_1, window_bounds = array<i64: 192, 256>}, {pipeline_mode = #tpu.pipeline_mode<synchronous>, transform_indices = @transform_2, window_bounds = array<i64: 1, 256>}, {pipeline_mode = #tpu.pipeline_mode<synchronous>, transform_indices = @transform_3, window_bounds = array<i64: 512, 512>}, {pipeline_mode = #tpu.pipeline_mode<synchronous>, transform_indices = @transform_4, window_bounds = array<i64: 1, 512>}, {pipeline_mode = #tpu.pipeline_mode<synchronous>, transform_indices = @transform_5, window_bounds = array<i64: 512, 128>}, {pipeline_mode = #tpu.pipeline_mode<synchronous>, transform_indices = @transform_6, window_bounds = array<i64: 1, 128>}, {transform_indices = @transform_7, window_bounds = array<i64: 1, 1, 128>}]} {
    %c0_i32 = arith.constant 0 : i32
    %0 = arith.cmpi eq, %arg1, %c0_i32 : i32
    %1 = arith.extui %0 : i1 to i32
    %c0_i32_0 = arith.constant 0 : i32
    %2 = arith.cmpi ne, %1, %c0_i32_0 : i32
    scf.if %2 {
      %cst_19 = arith.constant 0.000000e+00 : f32
      %25 = vector.broadcast %cst_19 : f32 to vector<1x256xf32>
      %c0_20 = arith.constant 0 : index
      %c0_21 = arith.constant 0 : index
      %26 = vector.load %arg10[%c0_20, %c0_21] : memref<1x256xf32, #tpu.memory_space<vmem>>, vector<1x256xf32>
      tpu.vector_store %arg10[%c0_20, %c0_21], %25 {strides = array<i32>} : memref<1x256xf32, #tpu.memory_space<vmem>>, vector<1x256xf32>,
      %cst_22 = arith.constant 0xFF800000 : f32
      %27 = vector.broadcast %cst_22 : f32 to vector<1x256xf32>
      %c0_23 = arith.constant 0 : index
      %c0_24 = arith.constant 0 : index
      %28 = vector.load %arg11[%c0_23, %c0_24] : memref<1x256xf32, #tpu.memory_space<vmem>>, vector<1x256xf32>
      tpu.vector_store %arg11[%c0_23, %c0_24], %27 {strides = array<i32>} : memref<1x256xf32, #tpu.memory_space<vmem>>, vector<1x256xf32>,
    } else {
    }
    %c0 = arith.constant 0 : index
    %c0_1 = arith.constant 0 : index
    %c0_2 = arith.constant 0 : index
    %3 = vector.load %arg2[%c0, %c0_1, %c0_2] : memref<1x32x192xbf16, #tpu.memory_space<vmem>>, vector<1x32x192xbf16>
    %4 = vector.shape_cast %3 : vector<1x32x192xbf16> to vector<32x192xbf16>
    %c0_3 = arith.constant 0 : index
    %c0_4 = arith.constant 0 : index
    %5 = vector.load %arg3[%c0_3, %c0_4] : memref<192x256xbf16, #tpu.memory_space<vmem>>, vector<192x256xbf16>
    %cst = arith.constant dense<0.000000e+00> : vector<32x256xf32>
    %6 = tpu.matmul %4, %5, %cst {dimension_numbers = #tpu.dot_dimension_numbers<[1], [0], [0], [1], [0, 0, 1, 1], [], []>} : vector<32x192xbf16>, vector<192x256xbf16>, vector<32x256xf32> -> vector<32x256xf32>
    %c0_5 = arith.constant 0 : index
    %c0_6 = arith.constant 0 : index
    %7 = vector.load %arg4[%c0_5, %c0_6] : memref<1x256xf32, #tpu.memory_space<vmem>>, vector<1x256xf32>
    %8 = vector.broadcast %7 : vector<1x256xf32> to vector<32x256xf32>
    %9 = arith.addf %6, %8 : vector<32x256xf32>
    %cst_7 = arith.constant 0.000000e+00 : f32
    %10 = vector.broadcast %cst_7 : f32 to vector<32x256xf32>
    %11 = arith.maximumf %9, %10 : vector<32x256xf32>
    %c0_8 = arith.constant 0 : index
    %c0_9 = arith.constant 0 : index
    %12 = vector.load %arg10[%c0_8, %c0_9] : memref<1x256xf32, #tpu.memory_space<vmem>>, vector<1x256xf32>
    %cst_10 = arith.constant dense<0.000000e+00> : vector<256xf32>
    %13 = vector.multi_reduction <add>, %11, %cst_10 [0] : vector<32x256xf32> to vector<256xf32>
    %14 = vector.shape_cast %13 : vector<256xf32> to vector<1x256xf32>
    %15 = arith.addf %12, %14 : vector<1x256xf32>
    %c0_11 = arith.constant 0 : index
    %c0_12 = arith.constant 0 : index
    %16 = vector.load %arg10[%c0_11, %c0_12] : memref<1x256xf32, #tpu.memory_space<vmem>>, vector<1x256xf32>
    tpu.vector_store %arg10[%c0_11, %c0_12], %15 {strides = array<i32>} : memref<1x256xf32, #tpu.memory_space<vmem>>, vector<1x256xf32>,
    %c0_13 = arith.constant 0 : index
    %c0_14 = arith.constant 0 : index
    %17 = vector.load %arg11[%c0_13, %c0_14] : memref<1x256xf32, #tpu.memory_space<vmem>>, vector<1x256xf32>
    %cst_15 = arith.constant dense<0xFF800000> : vector<256xf32>
    %18 = vector.multi_reduction <maximumf>, %11, %cst_15 [0] : vector<32x256xf32> to vector<256xf32>
    %19 = vector.shape_cast %18 : vector<256xf32> to vector<1x256xf32>
    %20 = arith.maximumf %17, %19 : vector<1x256xf32>
    %c0_16 = arith.constant 0 : index
    %c0_17 = arith.constant 0 : index
    %21 = vector.load %arg11[%c0_16, %c0_17] : memref<1x256xf32, #tpu.memory_space<vmem>>, vector<1x256xf32>
    tpu.vector_store %arg11[%c0_16, %c0_17], %20 {strides = array<i32>} : memref<1x256xf32, #tpu.memory_space<vmem>>, vector<1x256xf32>,
    %c1_i32 = arith.constant 1 : i32
    %22 = arith.cmpi eq, %arg1, %c1_i32 : i32
    %23 = arith.extui %22 : i1 to i32
    %c0_i32_18 = arith.constant 0 : i32
    %24 = arith.cmpi ne, %23, %c0_i32_18 : i32
    scf.if %24 {
      %c0_19 = arith.constant 0 : index
      %c0_20 = arith.constant 0 : index
      %25 = vector.load %arg10[%c0_19, %c0_20] : memref<1x256xf32, #tpu.memory_space<vmem>>, vector<1x256xf32>
      %cst_21 = arith.constant 1.562500e-02 : f32
      %26 = vector.broadcast %cst_21 : f32 to vector<1x256xf32>
      %27 = arith.mulf %25, %26 : vector<1x256xf32>
      %c0_22 = arith.constant 0 : index
      %c0_23 = arith.constant 0 : index
      %28 = vector.load %arg11[%c0_22, %c0_23] : memref<1x256xf32, #tpu.memory_space<vmem>>, vector<1x256xf32>
      %c0_24 = arith.constant 0 : index
      %c0_25 = arith.constant 0 : index
      %29 = vector.load %arg5[%c0_24, %c0_25] : memref<512x512xf32, #tpu.memory_space<vmem>>, vector<256x512xf32>
      %cst_26 = arith.constant dense<0.000000e+00> : vector<1x512xf32>
      %30 = tpu.matmul %27, %29, %cst_26 {dimension_numbers = #tpu.dot_dimension_numbers<[1], [0], [0], [1], [0, 0, 1, 1], [], []>} : vector<1x256xf32>, vector<256x512xf32>, vector<1x512xf32> -> vector<1x512xf32>
      %c256 = arith.constant 256 : index
      %c0_27 = arith.constant 0 : index
      %31 = vector.load %arg5[%c256, %c0_27] : memref<512x512xf32, #tpu.memory_space<vmem>>, vector<256x512xf32>
      %cst_28 = arith.constant dense<0.000000e+00> : vector<1x512xf32>
      %32 = tpu.matmul %28, %31, %cst_28 {dimension_numbers = #tpu.dot_dimension_numbers<[1], [0], [0], [1], [0, 0, 1, 1], [], []>} : vector<1x256xf32>, vector<256x512xf32>, vector<1x512xf32> -> vector<1x512xf32>
      %33 = arith.addf %30, %32 : vector<1x512xf32>
      %c0_29 = arith.constant 0 : index
      %c0_30 = arith.constant 0 : index
      %34 = vector.load %arg6[%c0_29, %c0_30] : memref<1x512xf32, #tpu.memory_space<vmem>>, vector<1x512xf32>
      %35 = arith.addf %33, %34 : vector<1x512xf32>
      %cst_31 = arith.constant 0.000000e+00 : f32
      %36 = vector.broadcast %cst_31 : f32 to vector<1x512xf32>
      %37 = arith.maximumf %35, %36 : vector<1x512xf32>
      %38 = math.absf %35 : vector<1x512xf32>
      %cst_32 = arith.constant 0.000000e+00 : f32
      %39 = vector.broadcast %cst_32 : f32 to vector<1x512xf32>
      %40 = arith.subf %39, %38 : vector<1x512xf32>
      %41 = math.exp %40 : vector<1x512xf32>
      %42 = math.log1p %41 : vector<1x512xf32>
      %43 = arith.addf %37, %42 : vector<1x512xf32>
      %44 = math.tanh %43 : vector<1x512xf32>
      %45 = arith.mulf %35, %44 : vector<1x512xf32>
      %c0_33 = arith.constant 0 : index
      %c0_34 = arith.constant 0 : index
      %46 = vector.load %arg7[%c0_33, %c0_34] : memref<512x128xf32, #tpu.memory_space<vmem>>, vector<512x128xf32>
      %cst_35 = arith.constant dense<0.000000e+00> : vector<1x128xf32>
      %47 = tpu.matmul %45, %46, %cst_35 {dimension_numbers = #tpu.dot_dimension_numbers<[1], [0], [0], [1], [0, 0, 1, 1], [], []>} : vector<1x512xf32>, vector<512x128xf32>, vector<1x128xf32> -> vector<1x128xf32>
      %c0_36 = arith.constant 0 : index
      %c0_37 = arith.constant 0 : index
      %48 = vector.load %arg8[%c0_36, %c0_37] : memref<1x128xf32, #tpu.memory_space<vmem>>, vector<1x128xf32>
      %49 = arith.addf %47, %48 : vector<1x128xf32>
      %c0_38 = arith.constant 0 : index
      %c0_39 = arith.constant 0 : index
      %c0_40 = arith.constant 0 : index
      %50 = vector.load %arg9[%c0_38, %c0_39, %c0_40] : memref<1x1x128xf32, #tpu.memory_space<vmem>>, vector<1x1x128xf32>
      %51 = vector.shape_cast %50 : vector<1x1x128xf32> to vector<1x128xf32>
      %52 = vector.shape_cast %49 : vector<1x128xf32> to vector<1x1x128xf32>
      tpu.vector_store %arg9[%c0_38, %c0_39, %c0_40], %52 {strides = array<i32>} : memref<1x1x128xf32, #tpu.memory_space<vmem>>, vector<1x1x128xf32>,
    } else {
    }
    return
  }
  func.func @transform_0(%arg0: i32, %arg1: i32) -> (i32, i32, i32) {
    %c0_i32 = arith.constant 0 : i32
    %c0_i32_0 = arith.constant 0 : i32
    return %arg0, %arg1, %c0_i32 : i32, i32, i32
  }
  func.func @transform_1(%arg0: i32, %arg1: i32) -> (i32, i32) {
    %c0_i32 = arith.constant 0 : i32
    %c0_i32_0 = arith.constant 0 : i32
    %c0_i32_1 = arith.constant 0 : i32
    return %c0_i32, %c0_i32_0 : i32, i32
  }
  func.func @transform_2(%arg0: i32, %arg1: i32) -> (i32, i32) {
    %c0_i32 = arith.constant 0 : i32
    %c0_i32_0 = arith.constant 0 : i32
    %c0_i32_1 = arith.constant 0 : i32
    return %c0_i32, %c0_i32_0 : i32, i32
  }
  func.func @transform_3(%arg0: i32, %arg1: i32) -> (i32, i32) {
    %c0_i32 = arith.constant 0 : i32
    %c0_i32_0 = arith.constant 0 : i32
    %c0_i32_1 = arith.constant 0 : i32
    return %c0_i32, %c0_i32_0 : i32, i32
  }
  func.func @transform_4(%arg0: i32, %arg1: i32) -> (i32, i32) {
    %c0_i32 = arith.constant 0 : i32
    %c0_i32_0 = arith.constant 0 : i32
    %c0_i32_1 = arith.constant 0 : i32
    return %c0_i32, %c0_i32_0 : i32, i32
  }
  func.func @transform_5(%arg0: i32, %arg1: i32) -> (i32, i32) {
    %c0_i32 = arith.constant 0 : i32
    %c0_i32_0 = arith.constant 0 : i32
    %c0_i32_1 = arith.constant 0 : i32
    return %c0_i32, %c0_i32_0 : i32, i32
  }
  func.func @transform_6(%arg0: i32, %arg1: i32) -> (i32, i32) {
    %c0_i32 = arith.constant 0 : i32
    %c0_i32_0 = arith.constant 0 : i32
    %c0_i32_1 = arith.constant 0 : i32
    return %c0_i32, %c0_i32_0 : i32, i32
  }
  func.func @transform_7(%arg0: i32, %arg1: i32) -> (i32, i32, i32) {
    %c0_i32 = arith.constant 0 : i32
    %c0_i32_0 = arith.constant 0 : i32
    %c0_i32_1 = arith.constant 0 : i32
    return %arg0, %c0_i32, %c0_i32_0 : i32, i32, i32
  }
}

</mosaic_0001>

<llo_original>
// kernel: model_forward.1
$region0: #{model_forward.1}
  #allocation0 [shape = 'u32[]', space=smem, size = 0x4, offset = 0x4, fixed_abs, tag = 'smem constant byte address 0x4 - core index']
  #allocation1 [shape = 'u32[144,128]{1,0:T(1,128)}', space=vmem, size = 0x12000, scoped, tag = 'internal scratch']
  #allocation2 [shape = 'f32[1,256]{1,0:T(1,128)}', space=vmem, size = 0x400, scoped, tag = 'scratch operand']
  #allocation3 [shape = 'f32[1,256]{1,0:T(1,128)}', space=vmem, size = 0x400, scoped, tag = 'scratch operand']
  %s0 = inlined_call_operand.vmem [shape: bf16[2,64,192], index: 0, kind: input, shape index: {}]
  %s1 = inlined_call_operand.vmem [shape: bf16[192,256], index: 1, kind: input, shape index: {}]
  %s2 = inlined_call_operand.vmem [shape: f32[1,256], index: 2, kind: input, shape index: {}]
  %s3 = inlined_call_operand.vmem [shape: f32[512,512], index: 3, kind: input, shape index: {}]
  %s4 = inlined_call_operand.vmem [shape: f32[1,512], index: 4, kind: input, shape index: {}]
  %s5 = inlined_call_operand.vmem [shape: f32[512,128], index: 5, kind: input, shape index: {}]
  %s6 = inlined_call_operand.vmem [shape: f32[1,128], index: 6, kind: input, shape index: {}]
  %s7 = inlined_call_operand.hbm [shape: f32[2,1,128], index: 7, kind: output, shape index: {}]
  %s8 = sld [smem:[#allocation0]]
  $region69: #{model_forward.1} parent=0
    _
  %s10 = ssub.s32 1, %s8
  %s11 = scalar_select 0, %s10, %s8
  $region1: #{model_forward.1} parent=0
    #allocation4 [shape = 'u8[1024]{0}', space=vmem, size = 0x400, scoped, tag = 'output window, operand 0']
    #allocation5 [shape = 's32[2]{0}', space=sflag, size = 0x8, scoped, tag = 'scoped memory for model_forward.1']
    %12 = vsyncpa [#allocation5], 0
    %s13 = scalar_lea.sflag [#allocation5], 1
    %14 = vsyncpa %s13, 0
    loop: start=0, step=1, limit=6
    $region2: #{model_forward.1} parent=1 // loop_pre_header
      _
    $region3: #{model_forward.1} parent=1 // loop_header
      %s16 = sphi 0, %s20
      %p17 = scmp.ge.s32.totalorder %s16, 6
      %s23 = sphi 0, %s35
      %s24 = sphi 0, %s31
      %s25 = sphi 0, %s23
      %s26 = sphi 0, %s24
      %s27 = sphi 0, %s25
      %s28 = sphi 0, %s26
      %s40 = sphi 0, %s42
      %s43 = sphi 0, %s40
      %s44 = sphi 0, %s43
      %s60 = sphi 0, %s44
      %s64 = sphi 0, %s64
      %s66 = sphi 0, %s64
      %s67 = sphi 0, %s66
      %s81 = sphi 0, %s67
      %s85 = sphi 0, %s85
      %s87 = sphi 0, %s85
      %s88 = sphi 0, %s87
      %s102 = sphi 0, %s88
      %s106 = sphi 0, %s106
      %s108 = sphi 0, %s106
      %s109 = sphi 0, %s108
      %s123 = sphi 0, %s109
      %s127 = sphi 0, %s127
      %s129 = sphi 0, %s127
      %s130 = sphi 0, %s129
      %s144 = sphi 0, %s130
      %s148 = sphi 0, %s148
      %s150 = sphi 0, %s148
      %s151 = sphi 0, %s150
      %s165 = sphi 0, %s151
      %s169 = sphi 0, %s169
      %s171 = sphi 0, %s169
      %s172 = sphi 0, %s171
      %s186 = sphi 0, %s172
      %s192 = sphi 0, %s194
      %s195 = sphi 0, %s192
      %s196 = sphi 0, %s195
      %s212 = sphi 0, %s196
    $region4: #{model_forward.1} parent=1 // loop_header_branch
      %19 = sbr.rel (%p17) target = $region8
    $region5: #{model_forward.1} parent=1 // loop_body
      %s21 = ssub.s32 %s16, 1
      %s22 = ssub.s32 %s16, 2
      %s29 = sadd.s32 1, %s24
      %p30 = scmp.ge.s32.totalorder %s29, 2
      %s31 = scalar_select %p30, 0, %s29
      %s32 = sadd.s32 1, %s23
      %s33 = scalar_select %p30, %s32, %s23
      %p34 = scmp.ge.s32.totalorder %s33, 2
      %s35 = scalar_select %p34, 0, %s33
      %s36 = ssub.s32 %s23, %s35
      %s37 = ssub.s32 %s24, %s31
      %s38 = sor.u32 %s36, %s37
      %p39 = scmp.eq.s32.totalorder %s38, 0
      %s41 = sadd.s32 %s40, 1
      %s42 = scalar_select %p39, %s40, %s41
      %p45 = pneg %p39
      %p46 = scmp.eq.s32.totalorder %s16, 3
      %p47 = por %p45, %p46
      %p48 = scmp.ne.s32.totalorder %s40, %s43
      %p49 = scmp.eq.s32.totalorder %s16, 0
      %p50 = por %p48, %p49
      %p51 = scmp.ne.s32.totalorder %s40, %s43
      %p52 = scmp.eq.s32.totalorder %s21, 3
      %p53 = por %p51, %p52
      %p54 = scmp.ne.s32.totalorder %s43, %s44
      %p55 = scmp.eq.s32.totalorder %s21, 0
      %p56 = por %p54, %p55
      %p57 = scmp.ne.s32.totalorder %s43, %s44
      %p58 = scmp.eq.s32.totalorder %s22, 3
      %p59 = por %p57, %p58
      %p61 = scmp.ne.s32.totalorder %s44, %s60
      %p62 = scmp.eq.s32.totalorder %s22, 0
      %p63 = por %p61, %p62
      %s65 = sadd.s32 %s64, 1
      %p68 = scmp.eq.s32.totalorder %s16, 3
      %p69 = scmp.ne.s32.totalorder %s64, %s66
      %p70 = scmp.eq.s32.totalorder %s16, 0
      %p71 = por %p69, %p70
      %p72 = scmp.ne.s32.totalorder %s64, %s66
      %p73 = scmp.eq.s32.totalorder %s21, 3
      %p74 = por %p72, %p73
      %p75 = scmp.ne.s32.totalorder %s66, %s67
      %p76 = scmp.eq.s32.totalorder %s21, 0
      %p77 = por %p75, %p76
      %p78 = scmp.ne.s32.totalorder %s66, %s67
      %p79 = scmp.eq.s32.totalorder %s22, 3
      %p80 = por %p78, %p79
      %p82 = scmp.ne.s32.totalorder %s67, %s81
      %p83 = scmp.eq.s32.totalorder %s22, 0
      %p84 = por %p82, %p83
      %s86 = sadd.s32 %s85, 1
      %p89 = scmp.eq.s32.totalorder %s16, 3
      %p90 = scmp.ne.s32.totalorder %s85, %s87
      %p91 = scmp.eq.s32.totalorder %s16, 0
      %p92 = por %p90, %p91
      %p93 = scmp.ne.s32.totalorder %s85, %s87
      %p94 = scmp.eq.s32.totalorder %s21, 3
      %p95 = por %p93, %p94
      %p96 = scmp.ne.s32.totalorder %s87, %s88
      %p97 = scmp.eq.s32.totalorder %s21, 0
      %p98 = por %p96, %p97
      %p99 = scmp.ne.s32.totalorder %s87, %s88
      %p100 = scmp.eq.s32.totalorder %s22, 3
      %p101 = por %p99, %p100
      %p103 = scmp.ne.s32.totalorder %s88, %s102
      %p104 = scmp.eq.s32.totalorder %s22, 0
      %p105 = por %p103, %p104
      %s107 = sadd.s32 %s106, 1
      %p110 = scmp.eq.s32.totalorder %s16, 3
      %p111 = scmp.ne.s32.totalorder %s106, %s108
      %p112 = scmp.eq.s32.totalorder %s16, 0
      %p113 = por %p111, %p112
      %p114 = scmp.ne.s32.totalorder %s106, %s108
      %p115 = scmp.eq.s32.totalorder %s21, 3
      %p116 = por %p114, %p115
      %p117 = scmp.ne.s32.totalorder %s108, %s109
      %p118 = scmp.eq.s32.totalorder %s21, 0
      %p119 = por %p117, %p118
      %p120 = scmp.ne.s32.totalorder %s108, %s109
      %p121 = scmp.eq.s32.totalorder %s22, 3
      %p122 = por %p120, %p121
      %p124 = scmp.ne.s32.totalorder %s109, %s123
      %p125 = scmp.eq.s32.totalorder %s22, 0
      %p126 = por %p124, %p125
      %s128 = sadd.s32 %s127, 1
      %p131 = scmp.eq.s32.totalorder %s16, 3
      %p132 = scmp.ne.s32.totalorder %s127, %s129
      %p133 = scmp.eq.s32.totalorder %s16, 0
      %p134 = por %p132, %p133
      %p135 = scmp.ne.s32.totalorder %s127, %s129
      %p136 = scmp.eq.s32.totalorder %s21, 3
      %p137 = por %p135, %p136
      %p138 = scmp.ne.s32.totalorder %s129, %s130
      %p139 = scmp.eq.s32.totalorder %s21, 0
      %p140 = por %p138, %p139
      %p141 = scmp.ne.s32.totalorder %s129, %s130
      %p142 = scmp.eq.s32.totalorder %s22, 3
      %p143 = por %p141, %p142
      %p145 = scmp.ne.s32.totalorder %s130, %s144
      %p146 = scmp.eq.s32.totalorder %s22, 0
      %p147 = por %p145, %p146
      %s149 = sadd.s32 %s148, 1
      %p152 = scmp.eq.s32.totalorder %s16, 3
      %p153 = scmp.ne.s32.totalorder %s148, %s150
      %p154 = scmp.eq.s32.totalorder %s16, 0
      %p155 = por %p153, %p154
      %p156 = scmp.ne.s32.totalorder %s148, %s150
      %p157 = scmp.eq.s32.totalorder %s21, 3
      %p158 = por %p156, %p157
      %p159 = scmp.ne.s32.totalorder %s150, %s151
      %p160 = scmp.eq.s32.totalorder %s21, 0
      %p161 = por %p159, %p160
      %p162 = scmp.ne.s32.totalorder %s150, %s151
      %p163 = scmp.eq.s32.totalorder %s22, 3
      %p164 = por %p162, %p163
      %p166 = scmp.ne.s32.totalorder %s151, %s165
      %p167 = scmp.eq.s32.totalorder %s22, 0
      %p168 = por %p166, %p167
      %s170 = sadd.s32 %s169, 1
      %p173 = scmp.eq.s32.totalorder %s16, 3
      %p174 = scmp.ne.s32.totalorder %s169, %s171
      %p175 = scmp.eq.s32.totalorder %s16, 0
      %p176 = por %p174, %p175
      %p177 = scmp.ne.s32.totalorder %s169, %s171
      %p178 = scmp.eq.s32.totalorder %s21, 3
      %p179 = por %p177, %p178
      %p180 = scmp.ne.s32.totalorder %s171, %s172
      %p181 = scmp.eq.s32.totalorder %s21, 0
      %p182 = por %p180, %p181
      %p183 = scmp.ne.s32.totalorder %s171, %s172
      %p184 = scmp.eq.s32.totalorder %s22, 3
      %p185 = por %p183, %p184
      %p187 = scmp.ne.s32.totalorder %s172, %s186
      %p188 = scmp.eq.s32.totalorder %s22, 0
      %p189 = por %p187, %p188
      %s190 = ssub.s32 %s23, %s35
      %p191 = scmp.eq.s32.totalorder %s190, 0
      %s193 = sadd.s32 %s192, 1
      %s194 = scalar_select %p191, %s192, %s193
      %p197 = pneg %p191
      %p198 = scmp.eq.s32.totalorder %s16, 3
      %p199 = por %p197, %p198
      %p200 = scmp.ne.s32.totalorder %s192, %s195
      %p201 = scmp.eq.s32.totalorder %s16, 0
      %p202 = por %p200, %p201
      %p203 = scmp.ne.s32.totalorder %s192, %s195
      %p204 = scmp.eq.s32.totalorder %s21, 3
      %p205 = por %p203, %p204
      %p206 = scmp.ne.s32.totalorder %s195, %s196
      %p207 = scmp.eq.s32.totalorder %s21, 0
      %p208 = por %p206, %p207
      %p209 = scmp.ne.s32.totalorder %s195, %s196
      %p210 = scmp.eq.s32.totalorder %s22, 3
      %p211 = por %p209, %p210
      %p213 = scmp.ne.s32.totalorder %s196, %s212
      %p214 = scmp.eq.s32.totalorder %s22, 0
      %p215 = por %p213, %p214
      %p216 = scmp.le.s32.totalorder 1, %s16
      %p217 = scmp.lt.s32.totalorder %s16, 5
      %p218 = pnand %p216, %p217
      %p219 = pneg %p218
      // Predicated region
      $region9: #{model_forward.1} parent=5 // pred_check
        _
      $region10: #{model_forward.1} parent=5 // pred_check_branch
        %221 = sbr.rel (%p218) target = $region12
      $region11: #{model_forward.1} parent=5 // pred_region
        %s222 = ssub.s32 %s16, 1
        // Predicated region
        $region13: #{model_forward.1} parent=11 // pred_check
          %p223 = pneg %p77
        $region14: #{model_forward.1} parent=11 // pred_check_branch
          %225 = sbr.rel (%p223) target = $region16
        $region15: #{model_forward.1} parent=11 // pred_region
          _
        $region16: #{model_forward.1} parent=11 // pred_fallthru
          _
        // Predicated region
        $region17: #{model_forward.1} parent=11 // pred_check
          %p226 = pneg %p98
        $region18: #{model_forward.1} parent=11 // pred_check_branch
          %228 = sbr.rel (%p226) target = $region20
        $region19: #{model_forward.1} parent=11 // pred_region
          _
        $region20: #{model_forward.1} parent=11 // pred_fallthru
          _
        // Predicated region
        $region21: #{model_forward.1} parent=11 // pred_check
          %p229 = pneg %p119
        $region22: #{model_forward.1} parent=11 // pred_check_branch
          %231 = sbr.rel (%p229) target = $region24
        $region23: #{model_forward.1} parent=11 // pred_region
          _
        $region24: #{model_forward.1} parent=11 // pred_fallthru
          _
        // Predicated region
        $region25: #{model_forward.1} parent=11 // pred_check
          %p232 = pneg %p140
        $region26: #{model_forward.1} parent=11 // pred_check_branch
          %234 = sbr.rel (%p232) target = $region28
        $region27: #{model_forward.1} parent=11 // pred_region
          _
        $region28: #{model_forward.1} parent=11 // pred_fallthru
          _
        // Predicated region
        $region29: #{model_forward.1} parent=11 // pred_check
          %p235 = pneg %p161
        $region30: #{model_forward.1} parent=11 // pred_check_branch
          %237 = sbr.rel (%p235) target = $region32
        $region31: #{model_forward.1} parent=11 // pred_region
          _
        $region32: #{model_forward.1} parent=11 // pred_fallthru
          _
        // Predicated region
        $region33: #{model_forward.1} parent=11 // pred_check
          %p238 = pneg %p182
        $region34: #{model_forward.1} parent=11 // pred_check_branch
          %240 = sbr.rel (%p238) target = $region36
        $region35: #{model_forward.1} parent=11 // pred_region
          _
        $region36: #{model_forward.1} parent=11 // pred_fallthru
          _
      $region12: #{model_forward.1} parent=5 // pred_fallthru
        _
      %p241 = scmp.lt.s32.totalorder %s16, 4
      // Predicated region
      $region37: #{model_forward.1} parent=5 // pred_check
        %p242 = pneg %p241
      $region38: #{model_forward.1} parent=5 // pred_check_branch
        %244 = sbr.rel (%p242) target = $region40
      $region39: #{model_forward.1} parent=5 // pred_region
        // Predicated region
        $region41: #{model_forward.1} parent=39 // pred_check
          %p245 = pneg %p50
        $region42: #{model_forward.1} parent=39 // pred_check_branch
          %247 = sbr.rel (%p245) target = $region44
        $region43: #{model_forward.1} parent=39 // pred_region
          %s248 = smul.u32 4, %s24
          %p249 = scmp.lt.s32.totalorder %s23, 1
          %s250 = scalar_select %p249, %s23, 1
          %p251 = scmp.lt.s32.totalorder %s248, 7
          %s252 = scalar_select %p251, %s248, 7
          %s253 = smul.addr %s252, 2
          %s254 = smul.addr %s250, 16
          %s255 = sadd.s32 %s253, %s254
          %s256 = smul.addr %s255, 4
          %s257 = scalar_lea.vmem %s0, %s256
          %s258 = smul.u32 4, %s24
        $region44: #{model_forward.1} parent=39 // pred_fallthru
          _
      $region40: #{model_forward.1} parent=5 // pred_fallthru
        _
      %p259 = scmp.le.s32.totalorder 1, %s16
      %p260 = scmp.lt.s32.totalorder %s16, 5
      %p261 = pnand %p259, %p260
      %p262 = pneg %p261
      // Predicated region
      $region45: #{model_forward.1} parent=5 // pred_check
        _
      $region46: #{model_forward.1} parent=5 // pred_check_branch
        %264 = sbr.rel (%p261) target = $region48
      $region47: #{model_forward.1} parent=5 // pred_region
        %s265 = ssub.s32 %s16, 1
        %s266 = smul.u32 4, %s26
        %p267 = scmp.lt.s32.totalorder %s25, 1
        %s268 = scalar_select %p267, %s25, 1
        %p269 = scmp.lt.s32.totalorder %s266, 7
        %s270 = scalar_select %p269, %s266, 7
        %s271 = smul.addr %s270, 2
        %s272 = smul.addr %s268, 16
        %s273 = sadd.s32 %s271, %s272
        %s274 = smul.addr %s273, 4
        %s275 = scalar_lea.vmem %s0, %s274
        %p276 = pneg %p56
        %p277 = pneg %p53
        %p278 = pneg %p77
        %p279 = pneg %p74
        %p280 = pneg %p98
        %p281 = pneg %p95
        %p282 = pneg %p119
        %p283 = pneg %p116
        %p284 = pneg %p140
        %p285 = pneg %p137
        %p286 = pneg %p161
        %p287 = pneg %p158
        %p288 = pneg %p182
        %p289 = pneg %p179
        %p290 = pneg %p208
        %p291 = pneg %p205
        %s292 = sand.u32 %s195, 1
        %s293 = scalar_lea.sflag [#allocation5], %s292
        %s294 = sand.u32 %s195, 1
        %s295 = scalar_lea.vmem [#allocation4], %s294
        %s296 = smul.u32 4, %s26
        %p297 = scmp.lt.s32.totalorder %s25, 1
        %s298 = scalar_select %p297, %s25, 1
        %p299 = scmp.lt.s32.totalorder %s296, 7
        %s300 = scalar_select %p299, %s296, 7
        %s301 = smul.addr %s300, 2
        %s302 = smul.addr %s298, 16
        %s303 = sadd.s32 %s301, %s302
        %s304 = smul.addr %s303, 4
        %s305 = scalar_lea.vmem %s0, %s304
        %s306 = smul.u32 4, %s26
        %p308 = scmp.eq.s32.totalorder %s26, 0
        // Predicated region
        $region49: #{model_forward.1} parent=47 // pred_check
          %p309 = pneg %p308
        $region50: #{model_forward.1} parent=47 // pred_check_branch
          %311 = sbr.rel (%p309) target = $region52
        $region51: #{model_forward.1} parent=47 // pred_region
          %v312 = vlaneseq
          %vm313 = vcmp.ge.s32.totalorder %v312, 0
          %vm314 = vcmp.lt.s32.totalorder %v312, 256
          %vm315 = vmand %vm313, %vm314
          %316 = vst.msk [vmem:[#allocation2] sm:$0x3] %vm315, 0.0
          %317 = vst.msk [vmem:[#allocation3] sm:$0x3] %vm315, -inf
        $region52: #{model_forward.1} parent=47 // pred_fallthru
          _
        %v318 = vld [vmem:[%s305] sm:$0xff]
        %v319 = vld [vmem:[%s305 + $0x8] sm:$0xff]
        %v320 = vld [vmem:[%s305 + $0x10] sm:$0xff]
        %v321 = vld [vmem:[%s305 + $0x18] sm:$0xff]
        %v322 = vld [vmem:[%s1] sm:$0xff]
        %v323 = vld [vmem:[%s1 + $0x8] sm:$0xff]
        %v324 = vld [vmem:[%s1 + $0x10] sm:$0xff]
        %v325 = vld [vmem:[%s1 + $0x18] sm:$0xff]
        %v326 = vld [vmem:[%s1 + $0x20] sm:$0xff]
        %v327 = vld [vmem:[%s1 + $0x28] sm:$0xff]
        %v328 = vld [vmem:[%s1 + $0x30] sm:$0xff]
        %v329 = vld [vmem:[%s1 + $0x38] sm:$0xff]
        %v330 = vld [vmem:[%s1 + $0x40] sm:$0xff]
        %v331 = vld [vmem:[%s1 + $0x48] sm:$0xff]
        %v332 = vld [vmem:[%s1 + $0x50] sm:$0xff]
        %v333 = vld [vmem:[%s1 + $0x58] sm:$0xff]
        %v334 = vld [vmem:[%s1 + $0x60] sm:$0xff]
        %v335 = vld [vmem:[%s1 + $0x68] sm:$0xff]
        %v336 = vld [vmem:[%s1 + $0x70] sm:$0xff]
        %v337 = vld [vmem:[%s1 + $0x78] sm:$0xff]
        %v338 = vld [vmem:[%s1 + $0x80] sm:$0xff]
        %v339 = vld [vmem:[%s1 + $0x88] sm:$0xff]
        %v340 = vld [vmem:[%s1 + $0x90] sm:$0xff]
        %v341 = vld [vmem:[%s1 + $0x98] sm:$0xff]
        %v342 = vld [vmem:[%s1 + $0xa0] sm:$0xff]
        %v343 = vld [vmem:[%s1 + $0xa8] sm:$0xff]
        %v344 = vld [vmem:[%s1 + $0xb0] sm:$0xff]
        %v345 = vld [vmem:[%s1 + $0xb8] sm:$0xff]
        %v346 = vld [vmem:[%s2] sm:$0x3]
        %v348 = vlaneseq
        %v349 = vshrl.u32 %v348, 7
        %v350 = vsub.s32 0, %v349
        %v351 = vrot.slane %v346, %v350
        %v352 = vlaneseq
        %v353 = vshrl.u32 %v352, 7
        %v354 = vsub.s32 1, %v353
        %v355 = vrot.slane %v346, %v354
        %v362 = vunpack.c.l.b16 %v318
        %v363 = vunpack.c.h.b16 %v318
        %v364 = vunpack.c.l.b16 %v319
        %v365 = vunpack.c.h.b16 %v319
        %v366 = vunpack.c.l.b16 %v320
        %v367 = vunpack.c.h.b16 %v320
        %v368 = vunpack.c.l.b16 %v321
        %v369 = vunpack.c.h.b16 %v321
        %v370 = vpack.c.b16 %v364, %v362
        %v371 = vpack.c.b16 %v365, %v363
        %v372 = vpack.c.b16 %v368, %v366
        %v373 = vpack.c.b16 %v369, %v367
        %v400 = vunpack.c.l.b16 %v322
        %v401 = vunpack.c.h.b16 %v322
        %v402 = vunpack.c.l.b16 %v323
        %v403 = vunpack.c.h.b16 %v323
        %v404 = vunpack.c.l.b16 %v324
        %v405 = vunpack.c.h.b16 %v324
        %v406 = vunpack.c.l.b16 %v325
        %v407 = vunpack.c.h.b16 %v325
        %v408 = vunpack.c.l.b16 %v326
        %v409 = vunpack.c.h.b16 %v326
        %v410 = vunpack.c.l.b16 %v327
        %v411 = vunpack.c.h.b16 %v327
        %v412 = vunpack.c.l.b16 %v328
        %v413 = vunpack.c.h.b16 %v328
        %v414 = vunpack.c.l.b16 %v329
        %v415 = vunpack.c.h.b16 %v329
        %v416 = vunpack.c.l.b16 %v330
        %v417 = vunpack.c.h.b16 %v330
        %v418 = vunpack.c.l.b16 %v331
        %v419 = vunpack.c.h.b16 %v331
        %v420 = vunpack.c.l.b16 %v332
        %v421 = vunpack.c.h.b16 %v332
        %v422 = vunpack.c.l.b16 %v333
        %v423 = vunpack.c.h.b16 %v333
        %v424 = vunpack.c.l.b16 %v334
        %v425 = vunpack.c.h.b16 %v334
        %v426 = vunpack.c.l.b16 %v335
        %v427 = vunpack.c.h.b16 %v335
        %v428 = vunpack.c.l.b16 %v336
        %v429 = vunpack.c.h.b16 %v336
        %v430 = vunpack.c.l.b16 %v337
        %v431 = vunpack.c.h.b16 %v337
        %v432 = vunpack.c.l.b16 %v338
        %v433 = vunpack.c.h.b16 %v338
        %v434 = vunpack.c.l.b16 %v339
        %v435 = vunpack.c.h.b16 %v339
        %v436 = vunpack.c.l.b16 %v340
        %v437 = vunpack.c.h.b16 %v340
        %v438 = vunpack.c.l.b16 %v341
        %v439 = vunpack.c.h.b16 %v341
        %v440 = vunpack.c.l.b16 %v342
        %v441 = vunpack.c.h.b16 %v342
        %v442 = vunpack.c.l.b16 %v343
        %v443 = vunpack.c.h.b16 %v343
        %v444 = vunpack.c.l.b16 %v344
        %v445 = vunpack.c.h.b16 %v344
        %v446 = vunpack.c.l.b16 %v345
        %v447 = vunpack.c.h.b16 %v345
        %v448 = vpack.c.b16 %v402, %v400
        %v449 = vpack.c.b16 %v403, %v401
        %v450 = vpack.c.b16 %v406, %v404
        %v451 = vpack.c.b16 %v407, %v405
        %v452 = vpack.c.b16 %v410, %v408
        %v453 = vpack.c.b16 %v411, %v409
        %v454 = vpack.c.b16 %v414, %v412
        %v455 = vpack.c.b16 %v415, %v413
        %v456 = vpack.c.b16 %v418, %v416
        %v457 = vpack.c.b16 %v419, %v417
        %v458 = vpack.c.b16 %v422, %v420
        %v459 = vpack.c.b16 %v423, %v421
        %v460 = vpack.c.b16 %v426, %v424
        %v461 = vpack.c.b16 %v427, %v425
        %v462 = vpack.c.b16 %v430, %v428
        %v463 = vpack.c.b16 %v431, %v429
        %v464 = vpack.c.b16 %v434, %v432
        %v465 = vpack.c.b16 %v435, %v433
        %v466 = vpack.c.b16 %v438, %v436
        %v467 = vpack.c.b16 %v439, %v437
        %v468 = vpack.c.b16 %v442, %v440
        %v469 = vpack.c.b16 %v443, %v441
        %v470 = vpack.c.b16 %v446, %v444
        %v471 = vpack.c.b16 %v447, %v445
        %vm496 = vcmask 523264
        %v498 = vsel %vm496, %v371, 0
        %v501 = vsel %vm496, %v373, 0
        %503 = vmatprep.subr.bf16.mxu0 %v463
        %504 = vmatpush1.bf16.msra.mxu0 %v462
        %505 = vmatprep.subr.bf16.mxu0 %v461
        %506 = vmatpush1.bf16.msra.mxu0 %v460
        %507 = vmatprep.subr.bf16.mxu0 %v459
        %508 = vmatpush1.bf16.msra.mxu0 %v458
        %509 = vmatprep.subr.bf16.mxu0 %v457
        %510 = vmatpush1.bf16.msra.mxu0 %v456
        %511 = vmatprep.subr.bf16.mxu0 %v455
        %512 = vmatpush1.bf16.msra.mxu0 %v454
        %513 = vmatprep.subr.bf16.mxu0 %v453
        %514 = vmatpush1.bf16.msra.mxu0 %v452
        %515 = vmatprep.subr.bf16.mxu0 %v451
        %516 = vmatpush1.bf16.msra.mxu0 %v450
        %517 = vmatprep.subr.bf16.mxu0 %v449
        %518 = vmatpush1.bf16.msra.mxu0 %v448
        %519 = vmatprep.subr.bf16.mxu0 0
        %520 = vmatpush2.bf16.msra.mxu0 0
        %521 = vmatprep.subr.bf16.mxu0 0
        %522 = vmatpush2.bf16.msra.mxu0 0
        %523 = vmatprep.subr.bf16.mxu0 0
        %524 = vmatpush2.bf16.msra.mxu0 0
        %525 = vmatprep.subr.bf16.mxu0 0
        %526 = vmatpush2.bf16.msra.mxu0 0
        %527 = vmatprep.subr.bf16.mxu0 %v471
        %528 = vmatpush2.bf16.msra.mxu0 %v470
        %529 = vmatprep.subr.bf16.mxu0 %v469
        %530 = vmatpush2.bf16.msra.mxu0 %v468
        %531 = vmatprep.subr.bf16.mxu0 %v467
        %532 = vmatpush2.bf16.msra.mxu0 %v466
        %533 = vmatprep.subr.bf16.mxu0 %v465
        %534 = vmatpush2.bf16.msra.mxu0 %v464
        %535 = vmatprep.mubr.bf16.mxu0 %v498
        %536 = vmatmul.mubr.bf16.gmra.mxu0 %v370
        %v537 = vpop.f32.mrf.mxu0
        %v538 = vadd.f32 %v351, %v537
        %v539 = vpop.f32.mrf.mxu0
        %v540 = vadd.f32 %v355, %v539
        %v541 = vpop.f32.mrf.mxu0
        %v542 = vadd.f32 %v351, %v541
        %v543 = vpop.f32.mrf.mxu0
        %v544 = vadd.f32 %v355, %v543
        %545 = vmatprep.mubr.bf16.mxu0 %v501
        %546 = vmatmul.mubr.bf16.gmra.mxu0 %v372
        %v547 = vpop.f32.mrf.mxu0
        %v548 = vadd.f32 %v351, %v547
        %v549 = vpop.f32.mrf.mxu0
        %v550 = vadd.f32 %v355, %v549
        %v551 = vpop.f32.mrf.mxu0
        %v552 = vadd.f32 %v351, %v551
        %v553 = vpop.f32.mrf.mxu0
        %v554 = vadd.f32 %v355, %v553
        %555 = vdwg.mxu0
        %v556 = vmax.f32 %v538, 0.0
        %v557 = vmax.f32 %v540, 0.0
        %v558 = vmax.f32 %v542, 0.0
        %v559 = vmax.f32 %v544, 0.0
        %v560 = vmax.f32 %v548, 0.0
        %v561 = vmax.f32 %v550, 0.0
        %v562 = vmax.f32 %v552, 0.0
        %v563 = vmax.f32 %v554, 0.0
        %v564 = vld [vmem:[#allocation2] sm:$0x3]
        %v565 = vadd.f32 %v556, %v558
        %v566 = vadd.f32 %v565, %v560
        %v567 = vadd.f32 %v566, %v562
        %v568 = vrot.slane %v567, 4
        %v569 = vadd.f32 %v567, %v568
        %v570 = vrot.slane %v569, 2
        %v571 = vadd.f32 %v569, %v570
        %v572 = vrot.slane %v571, 1
        %v573 = vadd.f32 %v571, %v572
        %v574 = vadd.f32 %v557, %v559
        %v575 = vadd.f32 %v574, %v561
        %v576 = vadd.f32 %v575, %v563
        %v577 = vrot.slane %v576, 4
        %v578 = vadd.f32 %v576, %v577
        %v579 = vrot.slane %v578, 2
        %v580 = vadd.f32 %v578, %v579
        %v581 = vrot.slane %v580, 1
        %v582 = vadd.f32 %v580, %v581
        %v585 = vcombine.low %v573, %v582
        %v587 = vunpack.c.l.s4 1966171168
        %v588 = vunpack.c.0.s8 %v587
        %v589 = vlaneseq
        %v590 = vshrl.u32 %v589, 7
        %v591 = vsub.s32 %v588, %v590
        %v592 = vrot.slane %v585, %v591
        %v594 = vunpack.c.l.s4 1966171168
        %v595 = vunpack.c.0.s8 %v594
        %v596 = vlaneseq
        %v597 = vshrl.u32 %v596, 7
        %v598 = vsub.s32 %v595, %v597
        %v599 = vrot.slane %v592, %v598
        %v601 = vadd.f32 %v564, %v599
        %v602 = vlaneseq
        %vm603 = vcmp.ge.s32.totalorder %v602, 0
        %vm604 = vcmp.lt.s32.totalorder %v602, 256
        %vm605 = vmand %vm603, %vm604
        %606 = vst.msk [vmem:[#allocation2] sm:$0x3] %vm605, %v601
        %v607 = vld [vmem:[#allocation3] sm:$0x3]
        %v608 = vmax.f32 %v556, %v560
        %v609 = vmax.f32 %v558, %v562
        %v610 = vmax.f32 %v608, %v609
        %v611 = vrot.slane %v610, 4
        %v612 = vmax.f32 %v610, %v611
        %v613 = vrot.slane %v612, 2
        %v614 = vmax.f32 %v612, %v613
        %v615 = vrot.slane %v614, 1
        %v616 = vmax.f32 %v614, %v615
        %v617 = vmax.f32 %v557, %v561
        %v618 = vmax.f32 %v559, %v563
        %v619 = vmax.f32 %v617, %v618
        %v620 = vrot.slane %v619, 4
        %v621 = vmax.f32 %v619, %v620
        %v622 = vrot.slane %v621, 2
        %v623 = vmax.f32 %v621, %v622
        %v624 = vrot.slane %v623, 1
        %v625 = vmax.f32 %v623, %v624
        %v628 = vcombine.low %v616, %v625
        %v630 = vunpack.c.l.s4 1966171168
        %v631 = vunpack.c.0.s8 %v630
        %v632 = vlaneseq
        %v633 = vshrl.u32 %v632, 7
        %v634 = vsub.s32 %v631, %v633
        %v635 = vrot.slane %v628, %v634
        %v637 = vunpack.c.l.s4 1966171168
        %v638 = vunpack.c.0.s8 %v637
        %v639 = vlaneseq
        %v640 = vshrl.u32 %v639, 7
        %v641 = vsub.s32 %v638, %v640
        %v642 = vrot.slane %v635, %v641
        %v644 = vmax.f32 %v607, %v642
        %645 = vst.msk [vmem:[#allocation3] sm:$0x3] %vm605, %v644
        %p646 = scmp.eq.s32.totalorder %s26, 1
        // Predicated region
        $region53: #{model_forward.1} parent=47 // pred_check
          %p647 = pneg %p646
        $region54: #{model_forward.1} parent=47 // pred_check_branch
          %649 = sbr.rel (%p647) target = $region56
        $region55: #{model_forward.1} parent=47 // pred_region
          %v650 = vld [vmem:[#allocation2] sm:$0x3]
          %v651 = vmul.f32 %v650, 0.015625
          %v652 = vld [vmem:[#allocation3] sm:$0x3]
          %v653 = vld [vmem:[%s3] sm:$0xff]
          %v654 = vld [vmem:[%s3 + $0x8] sm:$0xff]
          %v655 = vld [vmem:[%s3 + $0x10] sm:$0xff]
          %v656 = vld [vmem:[%s3 + $0x18] sm:$0xff]
          %v657 = vld [vmem:[%s3 + $0x20] sm:$0xff]
          %v658 = vld [vmem:[%s3 + $0x28] sm:$0xff]
          %v659 = vld [vmem:[%s3 + $0x30] sm:$0xff]
          %v660 = vld [vmem:[%s3 + $0x38] sm:$0xff]
          %v661 = vld [vmem:[%s3 + $0x40] sm:$0xff]
          %v662 = vld [vmem:[%s3 + $0x48] sm:$0xff]
          %v663 = vld [vmem:[%s3 + $0x50] sm:$0xff]
          %v664 = vld [vmem:[%s3 + $0x58] sm:$0xff]
          %v665 = vld [vmem:[%s3 + $0x60] sm:$0xff]
          %v666 = vld [vmem:[%s3 + $0x68] sm:$0xff]
          %v667 = vld [vmem:[%s3 + $0x70] sm:$0xff]
          %v668 = vld [vmem:[%s3 + $0x78] sm:$0xff]
          %v669 = vld [vmem:[%s3 + $0x80] sm:$0xff]
          %v670 = vld [vmem:[%s3 + $0x88] sm:$0xff]
          %v671 = vld [vmem:[%s3 + $0x90] sm:$0xff]
          %v672 = vld [vmem:[%s3 + $0x98] sm:$0xff]
          %v673 = vld [vmem:[%s3 + $0xa0] sm:$0xff]
          %v674 = vld [vmem:[%s3 + $0xa8] sm:$0xff]
          %v675 = vld [vmem:[%s3 + $0xb0] sm:$0xff]
          %v676 = vld [vmem:[%s3 + $0xb8] sm:$0xff]
          %v677 = vld [vmem:[%s3 + $0xc0] sm:$0xff]
          %v678 = vld [vmem:[%s3 + $0xc8] sm:$0xff]
          %v679 = vld [vmem:[%s3 + $0xd0] sm:$0xff]
          %v680 = vld [vmem:[%s3 + $0xd8] sm:$0xff]
          %v681 = vld [vmem:[%s3 + $0xe0] sm:$0xff]
          %v682 = vld [vmem:[%s3 + $0xe8] sm:$0xff]
          %v683 = vld [vmem:[%s3 + $0xf0] sm:$0xff]
          %v684 = vld [vmem:[%s3 + $0xf8] sm:$0xff]
          %v685 = vld [vmem:[%s3 + $0x100] sm:$0xff]
          %v686 = vld [vmem:[%s3 + $0x108] sm:$0xff]
          %v687 = vld [vmem:[%s3 + $0x110] sm:$0xff]
          %v688 = vld [vmem:[%s3 + $0x118] sm:$0xff]
          %v689 = vld [vmem:[%s3 + $0x120] sm:$0xff]
          %v690 = vld [vmem:[%s3 + $0x128] sm:$0xff]
          %v691 = vld [vmem:[%s3 + $0x130] sm:$0xff]
          %v692 = vld [vmem:[%s3 + $0x138] sm:$0xff]
          %v693 = vld [vmem:[%s3 + $0x140] sm:$0xff]
          %v694 = vld [vmem:[%s3 + $0x148] sm:$0xff]
          %v695 = vld [vmem:[%s3 + $0x150] sm:$0xff]
          %v696 = vld [vmem:[%s3 + $0x158] sm:$0xff]
          %v697 = vld [vmem:[%s3 + $0x160] sm:$0xff]
          %v698 = vld [vmem:[%s3 + $0x168] sm:$0xff]
          %v699 = vld [vmem:[%s3 + $0x170] sm:$0xff]
          %v700 = vld [vmem:[%s3 + $0x178] sm:$0xff]
          %v701 = vld [vmem:[%s3 + $0x180] sm:$0xff]
          %v702 = vld [vmem:[%s3 + $0x188] sm:$0xff]
          %v703 = vld [vmem:[%s3 + $0x190] sm:$0xff]
          %v704 = vld [vmem:[%s3 + $0x198] sm:$0xff]
          %v705 = vld [vmem:[%s3 + $0x1a0] sm:$0xff]
          %v706 = vld [vmem:[%s3 + $0x1a8] sm:$0xff]
          %v707 = vld [vmem:[%s3 + $0x1b0] sm:$0xff]
          %v708 = vld [vmem:[%s3 + $0x1b8] sm:$0xff]
          %v709 = vld [vmem:[%s3 + $0x1c0] sm:$0xff]
          %v710 = vld [vmem:[%s3 + $0x1c8] sm:$0xff]
          %v711 = vld [vmem:[%s3 + $0x1d0] sm:$0xff]
          %v712 = vld [vmem:[%s3 + $0x1d8] sm:$0xff]
          %v713 = vld [vmem:[%s3 + $0x1e0] sm:$0xff]
          %v714 = vld [vmem:[%s3 + $0x1e8] sm:$0xff]
          %v715 = vld [vmem:[%s3 + $0x1f0] sm:$0xff]
          %v716 = vld [vmem:[%s3 + $0x1f8] sm:$0xff]
          %v717 = vld [vmem:[%s3 + $0x200] sm:$0xff]
          %v718 = vld [vmem:[%s3 + $0x208] sm:$0xff]
          %v719 = vld [vmem:[%s3 + $0x210] sm:$0xff]
          %v720 = vld [vmem:[%s3 + $0x218] sm:$0xff]
          %v721 = vld [vmem:[%s3 + $0x220] sm:$0xff]
          %v722 = vld [vmem:[%s3 + $0x228] sm:$0xff]
          %v723 = vld [vmem:[%s3 + $0x230] sm:$0xff]
          %v724 = vld [vmem:[%s3 + $0x238] sm:$0xff]
          %v725 = vld [vmem:[%s3 + $0x240] sm:$0xff]
          %v726 = vld [vmem:[%s3 + $0x248] sm:$0xff]
          %v727 = vld [vmem:[%s3 + $0x250] sm:$0xff]
          %v728 = vld [vmem:[%s3 + $0x258] sm:$0xff]
          %v729 = vld [vmem:[%s3 + $0x260] sm:$0xff]
          %v730 = vld [vmem:[%s3 + $0x268] sm:$0xff]
          %v731 = vld [vmem:[%s3 + $0x270] sm:$0xff]
          %v732 = vld [vmem:[%s3 + $0x278] sm:$0xff]
          %v733 = vld [vmem:[%s3 + $0x280] sm:$0xff]
          %v734 = vld [vmem:[%s3 + $0x288] sm:$0xff]
          %v735 = vld [vmem:[%s3 + $0x290] sm:$0xff]
          %v736 = vld [vmem:[%s3 + $0x298] sm:$0xff]
          %v737 = vld [vmem:[%s3 + $0x2a0] sm:$0xff]
          %v738 = vld [vmem:[%s3 + $0x2a8] sm:$0xff]
          %v739 = vld [vmem:[%s3 + $0x2b0] sm:$0xff]
          %v740 = vld [vmem:[%s3 + $0x2b8] sm:$0xff]
          %v741 = vld [vmem:[%s3 + $0x2c0] sm:$0xff]
          %v742 = vld [vmem:[%s3 + $0x2c8] sm:$0xff]
          %v743 = vld [vmem:[%s3 + $0x2d0] sm:$0xff]
          %v744 = vld [vmem:[%s3 + $0x2d8] sm:$0xff]
          %v745 = vld [vmem:[%s3 + $0x2e0] sm:$0xff]
          %v746 = vld [vmem:[%s3 + $0x2e8] sm:$0xff]
          %v747 = vld [vmem:[%s3 + $0x2f0] sm:$0xff]
          %v748 = vld [vmem:[%s3 + $0x2f8] sm:$0xff]
          %v749 = vld [vmem:[%s3 + $0x300] sm:$0xff]
          %v750 = vld [vmem:[%s3 + $0x308] sm:$0xff]
          %v751 = vld [vmem:[%s3 + $0x310] sm:$0xff]
          %v752 = vld [vmem:[%s3 + $0x318] sm:$0xff]
          %v753 = vld [vmem:[%s3 + $0x320] sm:$0xff]
          %v754 = vld [vmem:[%s3 + $0x328] sm:$0xff]
          %v755 = vld [vmem:[%s3 + $0x330] sm:$0xff]
          %v756 = vld [vmem:[%s3 + $0x338] sm:$0xff]
          %v757 = vld [vmem:[%s3 + $0x340] sm:$0xff]
          %v758 = vld [vmem:[%s3 + $0x348] sm:$0xff]
          %v759 = vld [vmem:[%s3 + $0x350] sm:$0xff]
          %v760 = vld [vmem:[%s3 + $0x358] sm:$0xff]
          %v761 = vld [vmem:[%s3 + $0x360] sm:$0xff]
          %v762 = vld [vmem:[%s3 + $0x368] sm:$0xff]
          %v763 = vld [vmem:[%s3 + $0x370] sm:$0xff]
          %v764 = vld [vmem:[%s3 + $0x378] sm:$0xff]
          %v765 = vld [vmem:[%s3 + $0x380] sm:$0xff]
          %v766 = vld [vmem:[%s3 + $0x388] sm:$0xff]
          %v767 = vld [vmem:[%s3 + $0x390] sm:$0xff]
          %v768 = vld [vmem:[%s3 + $0x398] sm:$0xff]
          %v769 = vld [vmem:[%s3 + $0x3a0] sm:$0xff]
          %v770 = vld [vmem:[%s3 + $0x3a8] sm:$0xff]
          %v771 = vld [vmem:[%s3 + $0x3b0] sm:$0xff]
          %v772 = vld [vmem:[%s3 + $0x3b8] sm:$0xff]
          %v773 = vld [vmem:[%s3 + $0x3c0] sm:$0xff]
          %v774 = vld [vmem:[%s3 + $0x3c8] sm:$0xff]
          %v775 = vld [vmem:[%s3 + $0x3d0] sm:$0xff]
          %v776 = vld [vmem:[%s3 + $0x3d8] sm:$0xff]
          %v777 = vld [vmem:[%s3 + $0x3e0] sm:$0xff]
          %v778 = vld [vmem:[%s3 + $0x3e8] sm:$0xff]
          %v779 = vld [vmem:[%s3 + $0x3f0] sm:$0xff]
          %v780 = vld [vmem:[%s3 + $0x3f8] sm:$0xff]
          %v781 = vld [vmem:[%s3 + $0x400] sm:$0xff]
          %v782 = vld [vmem:[%s3 + $0x408] sm:$0xff]
          %v783 = vld [vmem:[%s3 + $0x410] sm:$0xff]
          %v784 = vld [vmem:[%s3 + $0x418] sm:$0xff]
          %v785 = vld [vmem:[%s3 + $0x420] sm:$0xff]
          %v786 = vld [vmem:[%s3 + $0x428] sm:$0xff]
          %v787 = vld [vmem:[%s3 + $0x430] sm:$0xff]
          %v788 = vld [vmem:[%s3 + $0x438] sm:$0xff]
          %v789 = vld [vmem:[%s3 + $0x440] sm:$0xff]
          %v790 = vld [vmem:[%s3 + $0x448] sm:$0xff]
          %v791 = vld [vmem:[%s3 + $0x450] sm:$0xff]
          %v792 = vld [vmem:[%s3 + $0x458] sm:$0xff]
          %v793 = vld [vmem:[%s3 + $0x460] sm:$0xff]
          %v794 = vld [vmem:[%s3 + $0x468] sm:$0xff]
          %v795 = vld [vmem:[%s3 + $0x470] sm:$0xff]
          %v796 = vld [vmem:[%s3 + $0x478] sm:$0xff]
          %v797 = vld [vmem:[%s3 + $0x480] sm:$0xff]
          %v798 = vld [vmem:[%s3 + $0x488] sm:$0xff]
          %v799 = vld [vmem:[%s3 + $0x490] sm:$0xff]
          %v800 = vld [vmem:[%s3 + $0x498] sm:$0xff]
          %v801 = vld [vmem:[%s3 + $0x4a0] sm:$0xff]
          %v802 = vld [vmem:[%s3 + $0x4a8] sm:$0xff]
          %v803 = vld [vmem:[%s3 + $0x4b0] sm:$0xff]
          %v804 = vld [vmem:[%s3 + $0x4b8] sm:$0xff]
          %v805 = vld [vmem:[%s3 + $0x4c0] sm:$0xff]
          %v806 = vld [vmem:[%s3 + $0x4c8] sm:$0xff]
          %v807 = vld [vmem:[%s3 + $0x4d0] sm:$0xff]
          %v808 = vld [vmem:[%s3 + $0x4d8] sm:$0xff]
          %v809 = vld [vmem:[%s3 + $0x4e0] sm:$0xff]
          %v810 = vld [vmem:[%s3 + $0x4e8] sm:$0xff]
          %v811 = vld [vmem:[%s3 + $0x4f0] sm:$0xff]
          %v812 = vld [vmem:[%s3 + $0x4f8] sm:$0xff]
          %v813 = vld [vmem:[%s3 + $0x500] sm:$0xff]
          %v814 = vld [vmem:[%s3 + $0x508] sm:$0xff]
          %v815 = vld [vmem:[%s3 + $0x510] sm:$0xff]
          %v816 = vld [vmem:[%s3 + $0x518] sm:$0xff]
          %v817 = vld [vmem:[%s3 + $0x520] sm:$0xff]
          %v818 = vld [vmem:[%s3 + $0x528] sm:$0xff]
          %v819 = vld [vmem:[%s3 + $0x530] sm:$0xff]
          %v820 = vld [vmem:[%s3 + $0x538] sm:$0xff]
          %v821 = vld [vmem:[%s3 + $0x540] sm:$0xff]
          %v822 = vld [vmem:[%s3 + $0x548] sm:$0xff]
          %v823 = vld [vmem:[%s3 + $0x550] sm:$0xff]
          %v824 = vld [vmem:[%s3 + $0x558] sm:$0xff]
          %v825 = vld [vmem:[%s3 + $0x560] sm:$0xff]
          %v826 = vld [vmem:[%s3 + $0x568] sm:$0xff]
          %v827 = vld [vmem:[%s3 + $0x570] sm:$0xff]
          %v828 = vld [vmem:[%s3 + $0x578] sm:$0xff]
          %v829 = vld [vmem:[%s3 + $0x580] sm:$0xff]
          %v830 = vld [vmem:[%s3 + $0x588] sm:$0xff]
          %v831 = vld [vmem:[%s3 + $0x590] sm:$0xff]
          %v832 = vld [vmem:[%s3 + $0x598] sm:$0xff]
          %v833 = vld [vmem:[%s3 + $0x5a0] sm:$0xff]
          %v834 = vld [vmem:[%s3 + $0x5a8] sm:$0xff]
          %v835 = vld [vmem:[%s3 + $0x5b0] sm:$0xff]
          %v836 = vld [vmem:[%s3 + $0x5b8] sm:$0xff]
          %v837 = vld [vmem:[%s3 + $0x5c0] sm:$0xff]
          %v838 = vld [vmem:[%s3 + $0x5c8] sm:$0xff]
          %v839 = vld [vmem:[%s3 + $0x5d0] sm:$0xff]
          %v840 = vld [vmem:[%s3 + $0x5d8] sm:$0xff]
          %v841 = vld [vmem:[%s3 + $0x5e0] sm:$0xff]
          %v842 = vld [vmem:[%s3 + $0x5e8] sm:$0xff]
          %v843 = vld [vmem:[%s3 + $0x5f0] sm:$0xff]
          %v844 = vld [vmem:[%s3 + $0x5f8] sm:$0xff]
          %v845 = vld [vmem:[%s3 + $0x600] sm:$0xff]
          %v846 = vld [vmem:[%s3 + $0x608] sm:$0xff]
          %v847 = vld [vmem:[%s3 + $0x610] sm:$0xff]
          %v848 = vld [vmem:[%s3 + $0x618] sm:$0xff]
          %v849 = vld [vmem:[%s3 + $0x620] sm:$0xff]
          %v850 = vld [vmem:[%s3 + $0x628] sm:$0xff]
          %v851 = vld [vmem:[%s3 + $0x630] sm:$0xff]
          %v852 = vld [vmem:[%s3 + $0x638] sm:$0xff]
          %v853 = vld [vmem:[%s3 + $0x640] sm:$0xff]
          %v854 = vld [vmem:[%s3 + $0x648] sm:$0xff]
          %v855 = vld [vmem:[%s3 + $0x650] sm:$0xff]
          %v856 = vld [vmem:[%s3 + $0x658] sm:$0xff]
          %v857 = vld [vmem:[%s3 + $0x660] sm:$0xff]
          %v858 = vld [vmem:[%s3 + $0x668] sm:$0xff]
          %v859 = vld [vmem:[%s3 + $0x670] sm:$0xff]
          %v860 = vld [vmem:[%s3 + $0x678] sm:$0xff]
          %v861 = vld [vmem:[%s3 + $0x680] sm:$0xff]
          %v862 = vld [vmem:[%s3 + $0x688] sm:$0xff]
          %v863 = vld [vmem:[%s3 + $0x690] sm:$0xff]
          %v864 = vld [vmem:[%s3 + $0x698] sm:$0xff]
          %v865 = vld [vmem:[%s3 + $0x6a0] sm:$0xff]
          %v866 = vld [vmem:[%s3 + $0x6a8] sm:$0xff]
          %v867 = vld [vmem:[%s3 + $0x6b0] sm:$0xff]
          %v868 = vld [vmem:[%s3 + $0x6b8] sm:$0xff]
          %v869 = vld [vmem:[%s3 + $0x6c0] sm:$0xff]
          %v870 = vld [vmem:[%s3 + $0x6c8] sm:$0xff]
          %v871 = vld [vmem:[%s3 + $0x6d0] sm:$0xff]
          %v872 = vld [vmem:[%s3 + $0x6d8] sm:$0xff]
          %v873 = vld [vmem:[%s3 + $0x6e0] sm:$0xff]
          %v874 = vld [vmem:[%s3 + $0x6e8] sm:$0xff]
          %v875 = vld [vmem:[%s3 + $0x6f0] sm:$0xff]
          %v876 = vld [vmem:[%s3 + $0x6f8] sm:$0xff]
          %v877 = vld [vmem:[%s3 + $0x700] sm:$0xff]
          %v878 = vld [vmem:[%s3 + $0x708] sm:$0xff]
          %v879 = vld [vmem:[%s3 + $0x710] sm:$0xff]
          %v880 = vld [vmem:[%s3 + $0x718] sm:$0xff]
          %v881 = vld [vmem:[%s3 + $0x720] sm:$0xff]
          %v882 = vld [vmem:[%s3 + $0x728] sm:$0xff]
          %v883 = vld [vmem:[%s3 + $0x730] sm:$0xff]
          %v884 = vld [vmem:[%s3 + $0x738] sm:$0xff]
          %v885 = vld [vmem:[%s3 + $0x740] sm:$0xff]
          %v886 = vld [vmem:[%s3 + $0x748] sm:$0xff]
          %v887 = vld [vmem:[%s3 + $0x750] sm:$0xff]
          %v888 = vld [vmem:[%s3 + $0x758] sm:$0xff]
          %v889 = vld [vmem:[%s3 + $0x760] sm:$0xff]
          %v890 = vld [vmem:[%s3 + $0x768] sm:$0xff]
          %v891 = vld [vmem:[%s3 + $0x770] sm:$0xff]
          %v892 = vld [vmem:[%s3 + $0x778] sm:$0xff]
          %v893 = vld [vmem:[%s3 + $0x780] sm:$0xff]
          %v894 = vld [vmem:[%s3 + $0x788] sm:$0xff]
          %v895 = vld [vmem:[%s3 + $0x790] sm:$0xff]
          %v896 = vld [vmem:[%s3 + $0x798] sm:$0xff]
          %v897 = vld [vmem:[%s3 + $0x7a0] sm:$0xff]
          %v898 = vld [vmem:[%s3 + $0x7a8] sm:$0xff]
          %v899 = vld [vmem:[%s3 + $0x7b0] sm:$0xff]
          %v900 = vld [vmem:[%s3 + $0x7b8] sm:$0xff]
          %v901 = vld [vmem:[%s3 + $0x7c0] sm:$0xff]
          %v902 = vld [vmem:[%s3 + $0x7c8] sm:$0xff]
          %v903 = vld [vmem:[%s3 + $0x7d0] sm:$0xff]
          %v904 = vld [vmem:[%s3 + $0x7d8] sm:$0xff]
          %v905 = vld [vmem:[%s3 + $0x7e0] sm:$0xff]
          %v906 = vld [vmem:[%s3 + $0x7e8] sm:$0xff]
          %v907 = vld [vmem:[%s3 + $0x7f0] sm:$0xff]
          %v908 = vld [vmem:[%s3 + $0x7f8] sm:$0xff]
          %v910 = vlaneseq
          %v911 = vshrl.u32 %v910, 7
          %v912 = vsub.s32 0, %v911
          %v913 = vrot.slane %v652, %v912
          %v914 = vlaneseq
          %v915 = vshrl.u32 %v914, 7
          %v916 = vsub.s32 1, %v915
          %v917 = vrot.slane %v652, %v916
          %920 = vmatprep.subr.mxu0 %v842
          %921 = vmatpush1.msra.mxu0 %v841
          %922 = vmatprep.subr.mxu0 %v838
          %923 = vmatpush1.msra.mxu0 %v837
          %924 = vmatprep.subr.mxu0 %v834
          %925 = vmatpush1.msra.mxu0 %v833
          %926 = vmatprep.subr.mxu0 %v830
          %927 = vmatpush1.msra.mxu0 %v829
          %928 = vmatprep.subr.mxu0 %v826
          %929 = vmatpush1.msra.mxu0 %v825
          %930 = vmatprep.subr.mxu0 %v822
          %931 = vmatpush1.msra.mxu0 %v821
          %932 = vmatprep.subr.mxu0 %v818
          %933 = vmatpush1.msra.mxu0 %v817
          %934 = vmatprep.subr.mxu0 %v814
          %935 = vmatpush1.msra.mxu0 %v813
          %936 = vmatprep.subr.mxu0 %v810
          %937 = vmatpush1.msra.mxu0 %v809
          %938 = vmatprep.subr.mxu0 %v806
          %939 = vmatpush1.msra.mxu0 %v805
          %940 = vmatprep.subr.mxu0 %v802
          %941 = vmatpush1.msra.mxu0 %v801
          %942 = vmatprep.subr.mxu0 %v798
          %943 = vmatpush1.msra.mxu0 %v797
          %944 = vmatprep.subr.mxu0 %v794
          %945 = vmatpush1.msra.mxu0 %v793
          %946 = vmatprep.subr.mxu0 %v790
          %947 = vmatpush1.msra.mxu0 %v789
          %948 = vmatprep.subr.mxu0 %v786
          %949 = vmatpush1.msra.mxu0 %v785
          %950 = vmatprep.subr.mxu0 %v782
          %951 = vmatpush1.msra.mxu0 %v781
          %952 = vmatprep.subr.mxu0 %v906
          %953 = vmatpush2.msra.mxu0 %v905
          %954 = vmatprep.subr.mxu0 %v902
          %955 = vmatpush2.msra.mxu0 %v901
          %956 = vmatprep.subr.mxu0 %v898
          %957 = vmatpush2.msra.mxu0 %v897
          %958 = vmatprep.subr.mxu0 %v894
          %959 = vmatpush2.msra.mxu0 %v893
          %960 = vmatprep.subr.mxu0 %v890
          %961 = vmatpush2.msra.mxu0 %v889
          %962 = vmatprep.subr.mxu0 %v886
          %963 = vmatpush2.msra.mxu0 %v885
          %964 = vmatprep.subr.mxu0 %v882
          %965 = vmatpush2.msra.mxu0 %v881
          %966 = vmatprep.subr.mxu0 %v878
          %967 = vmatpush2.msra.mxu0 %v877
          %968 = vmatprep.subr.mxu0 %v874
          %969 = vmatpush2.msra.mxu0 %v873
          %970 = vmatprep.subr.mxu0 %v870
          %971 = vmatpush2.msra.mxu0 %v869
          %972 = vmatprep.subr.mxu0 %v866
          %973 = vmatpush2.msra.mxu0 %v865
          %974 = vmatprep.subr.mxu0 %v862
          %975 = vmatpush2.msra.mxu0 %v861
          %976 = vmatprep.subr.mxu0 %v858
          %977 = vmatpush2.msra.mxu0 %v857
          %978 = vmatprep.subr.mxu0 %v854
          %979 = vmatpush2.msra.mxu0 %v853
          %980 = vmatprep.subr.mxu0 %v850
          %981 = vmatpush2.msra.mxu0 %v849
          %982 = vmatprep.subr.mxu0 %v846
          %983 = vmatpush2.msra.mxu0 %v845
          %984 = vmatprep.mubr.f32.mxu0 %v917
          %985 = vmatmul.mubr.f32.gmra.mxu0 %v913
          %v986 = vpop.f32.mrf.mxu0
          %v987 = vadd.f32 0.0, %v986
          %v988 = vpop.f32.mrf.mxu0
          %v989 = vadd.f32 0.0, %v988
          %990 = vdwg.mxu0
          %991 = vmatprep.subr.mxu0 %v844
          %992 = vmatpush1.msra.mxu0 %v843
          %993 = vmatprep.subr.mxu0 %v840
          %994 = vmatpush1.msra.mxu0 %v839
          %995 = vmatprep.subr.mxu0 %v836
          %996 = vmatpush1.msra.mxu0 %v835
          %997 = vmatprep.subr.mxu0 %v832
          %998 = vmatpush1.msra.mxu0 %v831
          %999 = vmatprep.subr.mxu0 %v828
          %1000 = vmatpush1.msra.mxu0 %v827
          %1001 = vmatprep.subr.mxu0 %v824
          %1002 = vmatpush1.msra.mxu0 %v823
          %1003 = vmatprep.subr.mxu0 %v820
          %1004 = vmatpush1.msra.mxu0 %v819
          %1005 = vmatprep.subr.mxu0 %v816
          %1006 = vmatpush1.msra.mxu0 %v815
          %1007 = vmatprep.subr.mxu0 %v812
          %1008 = vmatpush1.msra.mxu0 %v811
          %1009 = vmatprep.subr.mxu0 %v808
          %1010 = vmatpush1.msra.mxu0 %v807
          %1011 = vmatprep.subr.mxu0 %v804
          %1012 = vmatpush1.msra.mxu0 %v803
          %1013 = vmatprep.subr.mxu0 %v800
          %1014 = vmatpush1.msra.mxu0 %v799
          %1015 = vmatprep.subr.mxu0 %v796
          %1016 = vmatpush1.msra.mxu0 %v795
          %1017 = vmatprep.subr.mxu0 %v792
          %1018 = vmatpush1.msra.mxu0 %v791
          %1019 = vmatprep.subr.mxu0 %v788
          %1020 = vmatpush1.msra.mxu0 %v787
          %1021 = vmatprep.subr.mxu0 %v784
          %1022 = vmatpush1.msra.mxu0 %v783
          %1023 = vmatprep.subr.mxu0 %v908
          %1024 = vmatpush2.msra.mxu0 %v907
          %1025 = vmatprep.subr.mxu0 %v904
          %1026 = vmatpush2.msra.mxu0 %v903
          %1027 = vmatprep.subr.mxu0 %v900
          %1028 = vmatpush2.msra.mxu0 %v899
          %1029 = vmatprep.subr.mxu0 %v896
          %1030 = vmatpush2.msra.mxu0 %v895
          %1031 = vmatprep.subr.mxu0 %v892
          %1032 = vmatpush2.msra.mxu0 %v891
          %1033 = vmatprep.subr.mxu0 %v888
          %1034 = vmatpush2.msra.mxu0 %v887
          %1035 = vmatprep.subr.mxu0 %v884
          %1036 = vmatpush2.msra.mxu0 %v883
          %1037 = vmatprep.subr.mxu0 %v880
          %1038 = vmatpush2.msra.mxu0 %v879
          %1039 = vmatprep.subr.mxu0 %v876
          %1040 = vmatpush2.msra.mxu0 %v875
          %1041 = vmatprep.subr.mxu0 %v872
          %1042 = vmatpush2.msra.mxu0 %v871
          %1043 = vmatprep.subr.mxu0 %v868
          %1044 = vmatpush2.msra.mxu0 %v867
          %1045 = vmatprep.subr.mxu0 %v864
          %1046 = vmatpush2.msra.mxu0 %v863
          %1047 = vmatprep.subr.mxu0 %v860
          %1048 = vmatpush2.msra.mxu0 %v859
          %1049 = vmatprep.subr.mxu0 %v856
          %1050 = vmatpush2.msra.mxu0 %v855
          %1051 = vmatprep.subr.mxu0 %v852
          %1052 = vmatpush2.msra.mxu0 %v851
          %1053 = vmatprep.subr.mxu0 %v848
          %1054 = vmatpush2.msra.mxu0 %v847
          %1055 = vmatprep.mubr.f32.mxu0 %v917
          %1056 = vmatmul.mubr.f32.gmra.mxu0 %v913
          %v1057 = vpop.f32.mrf.mxu0
          %v1058 = vadd.f32 0.0, %v1057
          %v1059 = vpop.f32.mrf.mxu0
          %v1060 = vadd.f32 0.0, %v1059
          %1061 = vdwg.mxu0
          %v1063 = vlaneseq
          %v1064 = vshrl.u32 %v1063, 7
          %v1065 = vsub.s32 0, %v1064
          %v1066 = vrot.slane %v651, %v1065
          %v1067 = vlaneseq
          %v1068 = vshrl.u32 %v1067, 7
          %v1069 = vsub.s32 1, %v1068
          %v1070 = vrot.slane %v651, %v1069
          %1073 = vmatprep.subr.mxu0 %v714
          %1074 = vmatpush1.msra.mxu0 %v713
          %1075 = vmatprep.subr.mxu0 %v710
          %1076 = vmatpush1.msra.mxu0 %v709
          %1077 = vmatprep.subr.mxu0 %v706
          %1078 = vmatpush1.msra.mxu0 %v705
          %1079 = vmatprep.subr.mxu0 %v702
          %1080 = vmatpush1.msra.mxu0 %v701
          %1081 = vmatprep.subr.mxu0 %v698
          %1082 = vmatpush1.msra.mxu0 %v697
          %1083 = vmatprep.subr.mxu0 %v694
          %1084 = vmatpush1.msra.mxu0 %v693
          %1085 = vmatprep.subr.mxu0 %v690
          %1086 = vmatpush1.msra.mxu0 %v689
          %1087 = vmatprep.subr.mxu0 %v686
          %1088 = vmatpush1.msra.mxu0 %v685
          %1089 = vmatprep.subr.mxu0 %v682
          %1090 = vmatpush1.msra.mxu0 %v681
          %1091 = vmatprep.subr.mxu0 %v678
          %1092 = vmatpush1.msra.mxu0 %v677
          %1093 = vmatprep.subr.mxu0 %v674
          %1094 = vmatpush1.msra.mxu0 %v673
          %1095 = vmatprep.subr.mxu0 %v670
          %1096 = vmatpush1.msra.mxu0 %v669
          %1097 = vmatprep.subr.mxu0 %v666
          %1098 = vmatpush1.msra.mxu0 %v665
          %1099 = vmatprep.subr.mxu0 %v662
          %1100 = vmatpush1.msra.mxu0 %v661
          %1101 = vmatprep.subr.mxu0 %v658
          %1102 = vmatpush1.msra.mxu0 %v657
          %1103 = vmatprep.subr.mxu0 %v654
          %1104 = vmatpush1.msra.mxu0 %v653
          %1105 = vmatprep.subr.mxu0 %v778
          %1106 = vmatpush2.msra.mxu0 %v777
          %1107 = vmatprep.subr.mxu0 %v774
          %1108 = vmatpush2.msra.mxu0 %v773
          %1109 = vmatprep.subr.mxu0 %v770
          %1110 = vmatpush2.msra.mxu0 %v769
          %1111 = vmatprep.subr.mxu0 %v766
          %1112 = vmatpush2.msra.mxu0 %v765
          %1113 = vmatprep.subr.mxu0 %v762
          %1114 = vmatpush2.msra.mxu0 %v761
          %1115 = vmatprep.subr.mxu0 %v758
          %1116 = vmatpush2.msra.mxu0 %v757
          %1117 = vmatprep.subr.mxu0 %v754
          %1118 = vmatpush2.msra.mxu0 %v753
          %1119 = vmatprep.subr.mxu0 %v750
          %1120 = vmatpush2.msra.mxu0 %v749
          %1121 = vmatprep.subr.mxu0 %v746
          %1122 = vmatpush2.msra.mxu0 %v745
          %1123 = vmatprep.subr.mxu0 %v742
          %1124 = vmatpush2.msra.mxu0 %v741
          %1125 = vmatprep.subr.mxu0 %v738
          %1126 = vmatpush2.msra.mxu0 %v737
          %1127 = vmatprep.subr.mxu0 %v734
          %1128 = vmatpush2.msra.mxu0 %v733
          %1129 = vmatprep.subr.mxu0 %v730
          %1130 = vmatpush2.msra.mxu0 %v729
          %1131 = vmatprep.subr.mxu0 %v726
          %1132 = vmatpush2.msra.mxu0 %v725
          %1133 = vmatprep.subr.mxu0 %v722
          %1134 = vmatpush2.msra.mxu0 %v721
          %1135 = vmatprep.subr.mxu0 %v718
          %1136 = vmatpush2.msra.mxu0 %v717
          %1137 = vmatprep.mubr.f32.mxu0 %v1070
          %1138 = vmatmul.mubr.f32.gmra.mxu0 %v1066
          %v1139 = vpop.f32.mrf.mxu0
          %v1140 = vadd.f32 %v987, %v1139
          %v1141 = vpop.f32.mrf.mxu0
          %v1142 = vadd.f32 %v989, %v1141
          %1143 = vdwg.mxu0
          %1144 = vmatprep.subr.mxu0 %v716
          %1145 = vmatpush1.msra.mxu0 %v715
          %1146 = vmatprep.subr.mxu0 %v712
          %1147 = vmatpush1.msra.mxu0 %v711
          %1148 = vmatprep.subr.mxu0 %v708
          %1149 = vmatpush1.msra.mxu0 %v707
          %1150 = vmatprep.subr.mxu0 %v704
          %1151 = vmatpush1.msra.mxu0 %v703
          %1152 = vmatprep.subr.mxu0 %v700
          %1153 = vmatpush1.msra.mxu0 %v699
          %1154 = vmatprep.subr.mxu0 %v696
          %1155 = vmatpush1.msra.mxu0 %v695
          %1156 = vmatprep.subr.mxu0 %v692
          %1157 = vmatpush1.msra.mxu0 %v691
          %1158 = vmatprep.subr.mxu0 %v688
          %1159 = vmatpush1.msra.mxu0 %v687
          %1160 = vmatprep.subr.mxu0 %v684
          %1161 = vmatpush1.msra.mxu0 %v683
          %1162 = vmatprep.subr.mxu0 %v680
          %1163 = vmatpush1.msra.mxu0 %v679
          %1164 = vmatprep.subr.mxu0 %v676
          %1165 = vmatpush1.msra.mxu0 %v675
          %1166 = vmatprep.subr.mxu0 %v672
          %1167 = vmatpush1.msra.mxu0 %v671
          %1168 = vmatprep.subr.mxu0 %v668
          %1169 = vmatpush1.msra.mxu0 %v667
          %1170 = vmatprep.subr.mxu0 %v664
          %1171 = vmatpush1.msra.mxu0 %v663
          %1172 = vmatprep.subr.mxu0 %v660
          %1173 = vmatpush1.msra.mxu0 %v659
          %1174 = vmatprep.subr.mxu0 %v656
          %1175 = vmatpush1.msra.mxu0 %v655
          %1176 = vmatprep.subr.mxu0 %v780
          %1177 = vmatpush2.msra.mxu0 %v779
          %1178 = vmatprep.subr.mxu0 %v776
          %1179 = vmatpush2.msra.mxu0 %v775
          %1180 = vmatprep.subr.mxu0 %v772
          %1181 = vmatpush2.msra.mxu0 %v771
          %1182 = vmatprep.subr.mxu0 %v768
          %1183 = vmatpush2.msra.mxu0 %v767
          %1184 = vmatprep.subr.mxu0 %v764
          %1185 = vmatpush2.msra.mxu0 %v763
          %1186 = vmatprep.subr.mxu0 %v760
          %1187 = vmatpush2.msra.mxu0 %v759
          %1188 = vmatprep.subr.mxu0 %v756
          %1189 = vmatpush2.msra.mxu0 %v755
          %1190 = vmatprep.subr.mxu0 %v752
          %1191 = vmatpush2.msra.mxu0 %v751
          %1192 = vmatprep.subr.mxu0 %v748
          %1193 = vmatpush2.msra.mxu0 %v747
          %1194 = vmatprep.subr.mxu0 %v744
          %1195 = vmatpush2.msra.mxu0 %v743
          %1196 = vmatprep.subr.mxu0 %v740
          %1197 = vmatpush2.msra.mxu0 %v739
          %1198 = vmatprep.subr.mxu0 %v736
          %1199 = vmatpush2.msra.mxu0 %v735
          %1200 = vmatprep.subr.mxu0 %v732
          %1201 = vmatpush2.msra.mxu0 %v731
          %1202 = vmatprep.subr.mxu0 %v728
          %1203 = vmatpush2.msra.mxu0 %v727
          %1204 = vmatprep.subr.mxu0 %v724
          %1205 = vmatpush2.msra.mxu0 %v723
          %1206 = vmatprep.subr.mxu0 %v720
          %1207 = vmatpush2.msra.mxu0 %v719
          %1208 = vmatprep.mubr.f32.mxu0 %v1070
          %1209 = vmatmul.mubr.f32.gmra.mxu0 %v1066
          %v1210 = vpop.f32.mrf.mxu0
          %v1211 = vadd.f32 %v1058, %v1210
          %v1212 = vpop.f32.mrf.mxu0
          %v1213 = vadd.f32 %v1060, %v1212
          %1214 = vdwg.mxu0
          %v1215 = vld [vmem:[%s4] sm:$0xf]
          %v1217 = vlaneseq
          %v1218 = vshrl.u32 %v1217, 7
          %v1219 = vsub.s32 0, %v1218
          %v1220 = vrot.slane %v1215, %v1219
          %v1221 = vlaneseq
          %v1222 = vshrl.u32 %v1221, 7
          %v1223 = vsub.s32 1, %v1222
          %v1224 = vrot.slane %v1215, %v1223
          %v1225 = vlaneseq
          %v1226 = vshrl.u32 %v1225, 7
          %v1227 = vsub.s32 2, %v1226
          %v1228 = vrot.slane %v1215, %v1227
          %v1229 = vlaneseq
          %v1230 = vshrl.u32 %v1229, 7
          %v1231 = vsub.s32 3, %v1230
          %v1232 = vrot.slane %v1215, %v1231
          %v1237 = vadd.f32 %v1140, %v1220
          %v1238 = vadd.f32 %v1142, %v1224
          %v1239 = vadd.f32 %v1211, %v1228
          %v1240 = vadd.f32 %v1213, %v1232
          %v1241 = vmax.f32 %v1237, 0.0
          %v1242 = vmax.f32 %v1238, 0.0
          %v1243 = vmax.f32 %v1239, 0.0
          %v1244 = vmax.f32 %v1240, 0.0
          %v1245 = vand.u32 2147483647, %v1237
          %v1246 = vand.u32 2147483647, %v1238
          %v1247 = vand.u32 2147483647, %v1239
          %v1248 = vand.u32 2147483647, %v1240
          %v1249 = vsub.f32 0.0, %v1245
          %v1250 = vsub.f32 0.0, %v1246
          %v1251 = vsub.f32 0.0, %v1247
          %v1252 = vsub.f32 0.0, %v1248
          %v1253 = vmul.f32 %v1249, 1.442695
          %v1254 = vpow.pop %v1253
          %v1255 = vmul.f32 %v1250, 1.442695
          %v1256 = vpow.pop %v1255
          %v1257 = vmul.f32 %v1251, 1.442695
          %v1258 = vpow.pop %v1257
          %v1259 = vmul.f32 %v1252, 1.442695
          %v1260 = vpow.pop %v1259
          %v1261 = vadd.f32 %v1254, 1.0
          %v1262 = vlog2.pop %v1261
          %v1263 = vmul.f32 %v1262, 0.6931472
          %v1264 = vmul.f32 -0.5, %v1254
          %v1265 = vadd.f32 %v1264, 1.0
          %v1266 = vmul.f32 %v1265, %v1254
          %v1267 = vand.u32 2147483647, %v1254
          %vm1268 = vcmp.lt.f32.partialorder %v1267, 0.0004427343
          %v1269 = vsel %vm1268, %v1266, %v1263
          %v1270 = vadd.f32 %v1256, 1.0
          %v1271 = vlog2.pop %v1270
          %v1272 = vmul.f32 %v1271, 0.6931472
          %v1273 = vmul.f32 -0.5, %v1256
          %v1274 = vadd.f32 %v1273, 1.0
          %v1275 = vmul.f32 %v1274, %v1256
          %v1276 = vand.u32 2147483647, %v1256
          %vm1277 = vcmp.lt.f32.partialorder %v1276, 0.0004427343
          %v1278 = vsel %vm1277, %v1275, %v1272
          %v1279 = vadd.f32 %v1258, 1.0
          %v1280 = vlog2.pop %v1279
          %v1281 = vmul.f32 %v1280, 0.6931472
          %v1282 = vmul.f32 -0.5, %v1258
          %v1283 = vadd.f32 %v1282, 1.0
          %v1284 = vmul.f32 %v1283, %v1258
          %v1285 = vand.u32 2147483647, %v1258
          %vm1286 = vcmp.lt.f32.partialorder %v1285, 0.0004427343
          %v1287 = vsel %vm1286, %v1284, %v1281
          %v1288 = vadd.f32 %v1260, 1.0
          %v1289 = vlog2.pop %v1288
          %v1290 = vmul.f32 %v1289, 0.6931472
          %v1291 = vmul.f32 -0.5, %v1260
          %v1292 = vadd.f32 %v1291, 1.0
          %v1293 = vmul.f32 %v1292, %v1260
          %v1294 = vand.u32 2147483647, %v1260
          %vm1295 = vcmp.lt.f32.partialorder %v1294, 0.0004427343
          %v1296 = vsel %vm1295, %v1293, %v1290
          %v1297 = vadd.f32 %v1241, %v1269
          %v1298 = vadd.f32 %v1242, %v1278
          %v1299 = vadd.f32 %v1243, %v1287
          %v1300 = vadd.f32 %v1244, %v1296
          %v1301 = vtanh.pop %v1297
          %v1302 = vtanh.pop %v1298
          %v1303 = vtanh.pop %v1299
          %v1304 = vtanh.pop %v1300
          %v1305 = vmul.f32 %v1237, %v1301
          %v1306 = vmul.f32 %v1238, %v1302
          %v1307 = vmul.f32 %v1239, %v1303
          %v1308 = vmul.f32 %v1240, %v1304
          %v1309 = vld [vmem:[%s5] sm:$0xff]
          %v1310 = vld [vmem:[%s5 + $0x8] sm:$0xff]
          %v1311 = vld [vmem:[%s5 + $0x10] sm:$0xff]
          %v1312 = vld [vmem:[%s5 + $0x18] sm:$0xff]
          %v1313 = vld [vmem:[%s5 + $0x20] sm:$0xff]
          %v1314 = vld [vmem:[%s5 + $0x28] sm:$0xff]
          %v1315 = vld [vmem:[%s5 + $0x30] sm:$0xff]
          %v1316 = vld [vmem:[%s5 + $0x38] sm:$0xff]
          %v1317 = vld [vmem:[%s5 + $0x40] sm:$0xff]
          %v1318 = vld [vmem:[%s5 + $0x48] sm:$0xff]
          %v1319 = vld [vmem:[%s5 + $0x50] sm:$0xff]
          %v1320 = vld [vmem:[%s5 + $0x58] sm:$0xff]
          %v1321 = vld [vmem:[%s5 + $0x60] sm:$0xff]
          %v1322 = vld [vmem:[%s5 + $0x68] sm:$0xff]
          %v1323 = vld [vmem:[%s5 + $0x70] sm:$0xff]
          %v1324 = vld [vmem:[%s5 + $0x78] sm:$0xff]
          %v1325 = vld [vmem:[%s5 + $0x80] sm:$0xff]
          %v1326 = vld [vmem:[%s5 + $0x88] sm:$0xff]
          %v1327 = vld [vmem:[%s5 + $0x90] sm:$0xff]
          %v1328 = vld [vmem:[%s5 + $0x98] sm:$0xff]
          %v1329 = vld [vmem:[%s5 + $0xa0] sm:$0xff]
          %v1330 = vld [vmem:[%s5 + $0xa8] sm:$0xff]
          %v1331 = vld [vmem:[%s5 + $0xb0] sm:$0xff]
          %v1332 = vld [vmem:[%s5 + $0xb8] sm:$0xff]
          %v1333 = vld [vmem:[%s5 + $0xc0] sm:$0xff]
          %v1334 = vld [vmem:[%s5 + $0xc8] sm:$0xff]
          %v1335 = vld [vmem:[%s5 + $0xd0] sm:$0xff]
          %v1336 = vld [vmem:[%s5 + $0xd8] sm:$0xff]
          %v1337 = vld [vmem:[%s5 + $0xe0] sm:$0xff]
          %v1338 = vld [vmem:[%s5 + $0xe8] sm:$0xff]
          %v1339 = vld [vmem:[%s5 + $0xf0] sm:$0xff]
          %v1340 = vld [vmem:[%s5 + $0xf8] sm:$0xff]
          %v1341 = vld [vmem:[%s5 + $0x100] sm:$0xff]
          %v1342 = vld [vmem:[%s5 + $0x108] sm:$0xff]
          %v1343 = vld [vmem:[%s5 + $0x110] sm:$0xff]
          %v1344 = vld [vmem:[%s5 + $0x118] sm:$0xff]
          %v1345 = vld [vmem:[%s5 + $0x120] sm:$0xff]
          %v1346 = vld [vmem:[%s5 + $0x128] sm:$0xff]
          %v1347 = vld [vmem:[%s5 + $0x130] sm:$0xff]
          %v1348 = vld [vmem:[%s5 + $0x138] sm:$0xff]
          %v1349 = vld [vmem:[%s5 + $0x140] sm:$0xff]
          %v1350 = vld [vmem:[%s5 + $0x148] sm:$0xff]
          %v1351 = vld [vmem:[%s5 + $0x150] sm:$0xff]
          %v1352 = vld [vmem:[%s5 + $0x158] sm:$0xff]
          %v1353 = vld [vmem:[%s5 + $0x160] sm:$0xff]
          %v1354 = vld [vmem:[%s5 + $0x168] sm:$0xff]
          %v1355 = vld [vmem:[%s5 + $0x170] sm:$0xff]
          %v1356 = vld [vmem:[%s5 + $0x178] sm:$0xff]
          %v1357 = vld [vmem:[%s5 + $0x180] sm:$0xff]
          %v1358 = vld [vmem:[%s5 + $0x188] sm:$0xff]
          %v1359 = vld [vmem:[%s5 + $0x190] sm:$0xff]
          %v1360 = vld [vmem:[%s5 + $0x198] sm:$0xff]
          %v1361 = vld [vmem:[%s5 + $0x1a0] sm:$0xff]
          %v1362 = vld [vmem:[%s5 + $0x1a8] sm:$0xff]
          %v1363 = vld [vmem:[%s5 + $0x1b0] sm:$0xff]
          %v1364 = vld [vmem:[%s5 + $0x1b8] sm:$0xff]
          %v1365 = vld [vmem:[%s5 + $0x1c0] sm:$0xff]
          %v1366 = vld [vmem:[%s5 + $0x1c8] sm:$0xff]
          %v1367 = vld [vmem:[%s5 + $0x1d0] sm:$0xff]
          %v1368 = vld [vmem:[%s5 + $0x1d8] sm:$0xff]
          %v1369 = vld [vmem:[%s5 + $0x1e0] sm:$0xff]
          %v1370 = vld [vmem:[%s5 + $0x1e8] sm:$0xff]
          %v1371 = vld [vmem:[%s5 + $0x1f0] sm:$0xff]
          %v1372 = vld [vmem:[%s5 + $0x1f8] sm:$0xff]
          %v1373 = vld [vmem:[%s6] sm:$0x1]
          %1374 = vmatprep.subr.mxu0 0.0
          %1375 = vmatpush1.msra.mxu0 %v1324
          %1376 = vmatprep.subr.mxu0 0.0
          %1377 = vmatpush1.msra.mxu0 %v1323
          %1378 = vmatprep.subr.mxu0 0.0
          %1379 = vmatpush1.msra.mxu0 %v1322
          %1380 = vmatprep.subr.mxu0 0.0
          %1381 = vmatpush1.msra.mxu0 %v1321
          %1382 = vmatprep.subr.mxu0 0.0
          %1383 = vmatpush1.msra.mxu0 %v1320
          %1384 = vmatprep.subr.mxu0 0.0
          %1385 = vmatpush1.msra.mxu0 %v1319
          %1386 = vmatprep.subr.mxu0 0.0
          %1387 = vmatpush1.msra.mxu0 %v1318
          %1388 = vmatprep.subr.mxu0 0.0
          %1389 = vmatpush1.msra.mxu0 %v1317
          %1390 = vmatprep.subr.mxu0 0.0
          %1391 = vmatpush1.msra.mxu0 %v1316
          %1392 = vmatprep.subr.mxu0 0.0
          %1393 = vmatpush1.msra.mxu0 %v1315
          %1394 = vmatprep.subr.mxu0 0.0
          %1395 = vmatpush1.msra.mxu0 %v1314
          %1396 = vmatprep.subr.mxu0 0.0
          %1397 = vmatpush1.msra.mxu0 %v1313
          %1398 = vmatprep.subr.mxu0 0.0
          %1399 = vmatpush1.msra.mxu0 %v1312
          %1400 = vmatprep.subr.mxu0 0.0
          %1401 = vmatpush1.msra.mxu0 %v1311
          %1402 = vmatprep.subr.mxu0 0.0
          %1403 = vmatpush1.msra.mxu0 %v1310
          %1404 = vmatprep.subr.mxu0 0.0
          %1405 = vmatpush1.msra.mxu0 %v1309
          %1406 = vmatprep.subr.mxu0 0.0
          %1407 = vmatpush2.msra.mxu0 %v1340
          %1408 = vmatprep.subr.mxu0 0.0
          %1409 = vmatpush2.msra.mxu0 %v1339
          %1410 = vmatprep.subr.mxu0 0.0
          %1411 = vmatpush2.msra.mxu0 %v1338
          %1412 = vmatprep.subr.mxu0 0.0
          %1413 = vmatpush2.msra.mxu0 %v1337
          %1414 = vmatprep.subr.mxu0 0.0
          %1415 = vmatpush2.msra.mxu0 %v1336
          %1416 = vmatprep.subr.mxu0 0.0
          %1417 = vmatpush2.msra.mxu0 %v1335
          %1418 = vmatprep.subr.mxu0 0.0
          %1419 = vmatpush2.msra.mxu0 %v1334
          %1420 = vmatprep.subr.mxu0 0.0
          %1421 = vmatpush2.msra.mxu0 %v1333
          %1422 = vmatprep.subr.mxu0 0.0
          %1423 = vmatpush2.msra.mxu0 %v1332
          %1424 = vmatprep.subr.mxu0 0.0
          %1425 = vmatpush2.msra.mxu0 %v1331
          %1426 = vmatprep.subr.mxu0 0.0
          %1427 = vmatpush2.msra.mxu0 %v1330
          %1428 = vmatprep.subr.mxu0 0.0
          %1429 = vmatpush2.msra.mxu0 %v1329
          %1430 = vmatprep.subr.mxu0 0.0
          %1431 = vmatpush2.msra.mxu0 %v1328
          %1432 = vmatprep.subr.mxu0 0.0
          %1433 = vmatpush2.msra.mxu0 %v1327
          %1434 = vmatprep.subr.mxu0 0.0
          %1435 = vmatpush2.msra.mxu0 %v1326
          %1436 = vmatprep.subr.mxu0 0.0
          %1437 = vmatpush2.msra.mxu0 %v1325
          %1438 = vmatprep.mubr.f32.mxu0 %v1306
          %1439 = vmatmul.mubr.f32.gmra.mxu0 %v1305
          %v1440 = vpop.f32.mrf.mxu0
          %v1441 = vadd.f32 %v1373, %v1440
          %v1442 = vpop.f32.mrf.mxu0
          %1443 = vdwg.mxu0
          %1444 = vmatprep.subr.mxu0 0.0
          %1445 = vmatpush1.msra.mxu0 %v1356
          %1446 = vmatprep.subr.mxu0 0.0
          %1447 = vmatpush1.msra.mxu0 %v1355
          %1448 = vmatprep.subr.mxu0 0.0
          %1449 = vmatpush1.msra.mxu0 %v1354
          %1450 = vmatprep.subr.mxu0 0.0
          %1451 = vmatpush1.msra.mxu0 %v1353
          %1452 = vmatprep.subr.mxu0 0.0
          %1453 = vmatpush1.msra.mxu0 %v1352
          %1454 = vmatprep.subr.mxu0 0.0
          %1455 = vmatpush1.msra.mxu0 %v1351
          %1456 = vmatprep.subr.mxu0 0.0
          %1457 = vmatpush1.msra.mxu0 %v1350
          %1458 = vmatprep.subr.mxu0 0.0
          %1459 = vmatpush1.msra.mxu0 %v1349
          %1460 = vmatprep.subr.mxu0 0.0
          %1461 = vmatpush1.msra.mxu0 %v1348
          %1462 = vmatprep.subr.mxu0 0.0
          %1463 = vmatpush1.msra.mxu0 %v1347
          %1464 = vmatprep.subr.mxu0 0.0
          %1465 = vmatpush1.msra.mxu0 %v1346
          %1466 = vmatprep.subr.mxu0 0.0
          %1467 = vmatpush1.msra.mxu0 %v1345
          %1468 = vmatprep.subr.mxu0 0.0
          %1469 = vmatpush1.msra.mxu0 %v1344
          %1470 = vmatprep.subr.mxu0 0.0
          %1471 = vmatpush1.msra.mxu0 %v1343
          %1472 = vmatprep.subr.mxu0 0.0
          %1473 = vmatpush1.msra.mxu0 %v1342
          %1474 = vmatprep.subr.mxu0 0.0
          %1475 = vmatpush1.msra.mxu0 %v1341
          %1476 = vmatprep.subr.mxu0 0.0
          %1477 = vmatpush2.msra.mxu0 %v1372
          %1478 = vmatprep.subr.mxu0 0.0
          %1479 = vmatpush2.msra.mxu0 %v1371
          %1480 = vmatprep.subr.mxu0 0.0
          %1481 = vmatpush2.msra.mxu0 %v1370
          %1482 = vmatprep.subr.mxu0 0.0
          %1483 = vmatpush2.msra.mxu0 %v1369
          %1484 = vmatprep.subr.mxu0 0.0
          %1485 = vmatpush2.msra.mxu0 %v1368
          %1486 = vmatprep.subr.mxu0 0.0
          %1487 = vmatpush2.msra.mxu0 %v1367
          %1488 = vmatprep.subr.mxu0 0.0
          %1489 = vmatpush2.msra.mxu0 %v1366
          %1490 = vmatprep.subr.mxu0 0.0
          %1491 = vmatpush2.msra.mxu0 %v1365
          %1492 = vmatprep.subr.mxu0 0.0
          %1493 = vmatpush2.msra.mxu0 %v1364
          %1494 = vmatprep.subr.mxu0 0.0
          %1495 = vmatpush2.msra.mxu0 %v1363
          %1496 = vmatprep.subr.mxu0 0.0
          %1497 = vmatpush2.msra.mxu0 %v1362
          %1498 = vmatprep.subr.mxu0 0.0
          %1499 = vmatpush2.msra.mxu0 %v1361
          %1500 = vmatprep.subr.mxu0 0.0
          %1501 = vmatpush2.msra.mxu0 %v1360
          %1502 = vmatprep.subr.mxu0 0.0
          %1503 = vmatpush2.msra.mxu0 %v1359
          %1504 = vmatprep.subr.mxu0 0.0
          %1505 = vmatpush2.msra.mxu0 %v1358
          %1506 = vmatprep.subr.mxu0 0.0
          %1507 = vmatpush2.msra.mxu0 %v1357
          %1508 = vmatprep.mubr.f32.mxu0 %v1308
          %1509 = vmatmul.mubr.f32.gmra.mxu0 %v1307
          %v1510 = vpop.f32.mrf.mxu0
          %v1511 = vadd.f32 %v1441, %v1510
          %v1512 = vpop.f32.mrf.mxu0
          %1513 = vdwg.mxu0
          %1514 = vst [vmem:[%s295] sm:$0x1] %v1511
        $region56: #{model_forward.1} parent=47 // pred_fallthru
          _
        %s1515 = sand.u32 %s195, 1
        %s1516 = scalar_lea.sflag [#allocation5], %s1515
        %s1517 = sand.u32 %s195, 1
        %s1518 = scalar_lea.vmem [#allocation4], %s1517
        // Predicated region
        $region57: #{model_forward.1} parent=47 // pred_check
          %p1519 = pneg %p205
        $region58: #{model_forward.1} parent=47 // pred_check_branch
          %1521 = sbr.rel (%p1519) target = $region60
        $region59: #{model_forward.1} parent=47 // pred_region
          %s1523 = ssub.s32 16, 16
          %1524 = vsyncadd %s1516, %s1523
          %s1525 = smul.addr %s25, 16
          %s1526 = scalar_lea.hbm %s7, %s1525
          %s1528 = sshll.u32 %s1518, 4
          %s1529 = int_to_ptr.vmem [resolvable:$true] %s1528
          %1531 = dma.vmem_to_hbm [thread:$0]  %s1529, 16, %s1526, %s1516
        $region60: #{model_forward.1} parent=47 // pred_fallthru
          _
      $region48: #{model_forward.1} parent=5 // pred_fallthru
        _
      %p1532 = scmp.le.s32.totalorder 2, %s16
      // Predicated region
      $region61: #{model_forward.1} parent=5 // pred_check
        %p1533 = pneg %p1532
      $region62: #{model_forward.1} parent=5 // pred_check_branch
        %1535 = sbr.rel (%p1533) target = $region64
      $region63: #{model_forward.1} parent=5 // pred_region
        %s1536 = ssub.s32 %s16, 2
        // Predicated region
        $region65: #{model_forward.1} parent=63 // pred_check
          %p1537 = pneg %p211
        $region66: #{model_forward.1} parent=63 // pred_check_branch
          %1539 = sbr.rel (%p1537) target = $region68
        $region67: #{model_forward.1} parent=63 // pred_region
          %s1540 = sand.u32 %s196, 1
          %s1541 = scalar_lea.sflag [#allocation5], %s1540
          %s1542 = sand.u32 %s196, 1
          %s1543 = scalar_lea.vmem [#allocation4], %s1542
          %1544 = dma.done %s1541, 16
        $region68: #{model_forward.1} parent=63 // pred_fallthru
          _
      $region64: #{model_forward.1} parent=5 // pred_fallthru
        _
    $region6: #{model_forward.1} parent=1 // loop_footer
      %s20 = sadd.s32 1, %s16
    $region7: #{model_forward.1} parent=1 // loop_footer_branch
      %15 = sbr.rel target = $region3
    $region8: #{model_forward.1} parent=1 // loop_exit
      _
    %1545 = vsyncpa [#allocation5], 1
    %s1546 = scalar_lea.sflag [#allocation5], 1
    %1547 = vsyncpa %s1546, 1

</llo_original>
